<compile_context>
chip_gen: v7x
topology: tpu7x:2x2x1
jax: 0.10.0
libtpu: 0.0.40
codegen_flags: <defaults>
</compile_context>

<pallas_src>
import functools

import jax
import jax.numpy as jnp
from jax.experimental import pallas as pl
from jax.experimental.pallas import tpu as pltpu


# ------------------------------------------------------------------ utilities
def _compute_pad(k, s, size):
    """Replicates Conv3d._compute_pad from the PyTorch reference."""
    if size % s == 0:
        return max(k - s, 0)
    return max(k - size % s, 0)


# ------------------------------------------------------------------ kernel
def _conv_bn_relu_kernel(x_ref, w_ref, shift_ref, o_ref, patch_ref, *,
                         kT, kH, D_out, H_out, WC_in, sd, sh):
    """One grid step = one batch element (all D_out x H_out x W_out outputs).

    x_ref:     (D_p, H_p, W_p*C_in)              bf16  padded input slab
    w_ref:     (kT*kH*W_p*C_in, W_out*C_out)     bf16  block-Toeplitz weights (BN scale folded)
    shift_ref: (1, W_out*C_out)                  f32   BN shift (beta - mean*scale), W-tiled
    o_ref:     (D_out, H_out, W_out*C_out)       f32   conv+BN+ReLU output (packed, unpadded)
    patch_ref: (D_out*H_out, kT*kH*W_p*C_in)     bf16  VMEM scratch patch matrix
    """
    R = D_out * H_out

    # im2col into the scratch: 9 (= kT*kH) full-lane-width slab loads, each written to a
    # static lane offset.  Every output row (d_out, h_out) ends up with the full padded
    # W row for each (kt, kh) tap; the kW window selection lives in w_ref's zero pattern.
    for kt in range(kT):
        if sd == 1:
            d_idx = slice(kt, kt + D_out)
        else:
            d_idx = pl.ds(kt, D_out, stride=sd)
        for kh in range(kH):
            if sh == 1:
                h_idx = slice(kh, kh + H_out)
            else:
                h_idx = pl.ds(kh, H_out, stride=sh)
            piece = x_ref[d_idx, h_idx, :]                     # (D_out, H_out, WC_in)
            off = (kt * kH + kh) * WC_in
            patch_ref[:, off:off + WC_in] = piece.reshape(R, WC_in)   # major-dim merge only

    # Single bf16 x bf16 -> f32 matmul on the MXU for the whole step.
    acc = jnp.dot(patch_ref[...], w_ref[...],
                  preferred_element_type=jnp.float32)          # (R, W_out*C_out)

    # Fused BN shift + ReLU epilogue on the packed (lane-dense) result, then one
    # unmasked full-width store.
    y = jnp.maximum(acc + shift_ref[...], 0.0)
    o_ref[...] = y.reshape(D_out, H_out, y.shape[-1])


# ------------------------------------------------------------------ wrapper
def conv3d_block(x, weight, gamma, beta, running_mean, running_var,
                 stride=(1, 1, 1), eps=1e-3):
    """x: (N, C_in, D, H, W) float32 (NCDHW).  Returns (N, C_out, D_out, H_out, W_out)."""
    N, C_in, D, H, W = x.shape
    C_out, _, kT, kH, kW = weight.shape
    sd, sh, sw = stride

    # --- TF-"SAME" padding exactly as in the reference Conv3d._same_pad -----
    pad_t = _compute_pad(kT, sd, D)
    pad_h = _compute_pad(kH, sh, H)
    pad_w = _compute_pad(kW, sw, W)

    x_ndhwc = jnp.transpose(x, (0, 2, 3, 4, 1))                # NCDHW -> NDHWC
    x_p = jnp.pad(
        x_ndhwc,
        ((0, 0),
         (pad_t // 2, pad_t - pad_t // 2),
         (pad_h // 2, pad_h - pad_h // 2),
         (pad_w // 2, pad_w - pad_w // 2),
         (0, 0)))
    D_p, H_p, W_p = x_p.shape[1:4]
    D_out = (D_p - kT) // sd + 1
    H_out = (H_p - kH) // sh + 1
    W_out = (W_p - kW) // sw + 1

    WC_in = W_p * C_in
    WC_out = W_out * C_out
    K = kT * kH * WC_in

    # Fold (W_p, C_in) into one lane-dense trailing dim; bf16 MXU inputs.
    x_p3 = x_p.reshape(N, D_p, H_p, WC_in).astype(jnp.bfloat16)

    # --- fold eval-mode BN into the weights (scale) and a shift vector -------
    scale = (gamma / jnp.sqrt(running_var + eps)).astype(jnp.float32)   # (C_out,)
    shift = (beta - running_mean * scale).astype(jnp.float32)           # (C_out,)

    # --- block-Toeplitz (over W) weight matrix, BN scale folded in f32 -------
    # B[(kt,kh,w_in,c_in), (w_out,c_out)] = W[c_out,c_in,kt,kh,kw]*scale[c_out]
    #   where kw = w_in - w_out*sw must lie in [0, kW).
    w_perm = jnp.transpose(weight, (2, 3, 4, 1, 0)).astype(jnp.float32)  # (kT,kH,kW,C_in,C_out)
    w_perm = w_perm * scale[None, None, None, None, :]
    sel = (jnp.arange(W_p)[:, None, None] ==
           (jnp.arange(W_out)[None, None, :] * sw +
            jnp.arange(kW)[None, :, None])).astype(jnp.float32)          # (W_p, kW, W_out)
    w_toep = jnp.einsum('pkw,abkcd->abpcwd', sel, w_perm)                # (kT,kH,W_p,C_in,W_out,C_out)
    w_mat = w_toep.reshape(K, WC_out).astype(jnp.bfloat16)

    # Shift tiled over w_out so it matches the packed (w_out, c_out) output lanes.
    shift_packed = jnp.tile(shift, (W_out,)).reshape(1, WC_out)

    kernel = functools.partial(
        _conv_bn_relu_kernel,
        kT=kT, kH=kH, D_out=D_out, H_out=H_out, WC_in=WC_in, sd=sd, sh=sh)

    out = pl.pallas_call(
        kernel,
        out_shape=jax.ShapeDtypeStruct((N, D_out, H_out, WC_out), jnp.float32),
        grid_spec=pltpu.PrefetchScalarGridSpec(
            num_scalar_prefetch=0,
            grid=(N,),
            in_specs=[
                # one padded (D_p, H_p, W_p*C_in) slab per batch element
                pl.BlockSpec((None, D_p, H_p, WC_in), lambda n: (n, 0, 0, 0)),
                # weights / shift: constant block index -> stay resident across steps
                pl.BlockSpec((K, WC_out), lambda n: (0, 0)),
                pl.BlockSpec((1, WC_out), lambda n: (0, 0)),
            ],
            out_specs=pl.BlockSpec((None, D_out, H_out, WC_out),
                                   lambda n: (n, 0, 0, 0)),
            scratch_shapes=[pltpu.VMEM((D_out * H_out, K), jnp.bfloat16)],
        ),
        compiler_params=pltpu.CompilerParams(
            dimension_semantics=("parallel",)),
    )(x_p3, w_mat, shift_packed)

    out = out.reshape(N, D_out, H_out, W_out, C_out)
    return jnp.transpose(out, (0, 4, 1, 2, 3))                 # back to NCDHW


# ------------------------------------------------------------------ reference
def _reference(x, weight, gamma, beta, running_mean, running_var,
               stride=(1, 1, 1), eps=1e-3):
    N, C_in, D, H, W = x.shape
    C_out, _, kT, kH, kW = weight.shape
    sd, sh, sw = stride
    pad_t = _compute_pad(kT, sd, D)
    pad_h = _compute_pad(kH, sh, H)
    pad_w = _compute_pad(kW, sw, W)
    x_p = jnp.pad(
        x,
        ((0, 0), (0, 0),
         (pad_t // 2, pad_t - pad_t // 2),
         (pad_h // 2, pad_h - pad_h // 2),
         (pad_w // 2, pad_w - pad_w // 2)))
    y = jax.lax.conv_general_dilated(
        x_p, weight, window_strides=stride, padding='VALID',
        dimension_numbers=('NCDHW', 'OIDHW', 'NCDHW'))
    scale = gamma / jnp.sqrt(running_var + eps)
    shift = beta - running_mean * scale
    y = y * scale[None, :, None, None, None] + shift[None, :, None, None, None]
    return jnp.maximum(y, 0.0)


# ------------------------------------------------------------------ main
if __name__ == "__main__":
    key = jax.random.PRNGKey(0)
    k_x, k_w, k_g, k_b, k_m, k_v = jax.random.split(key, 6)

    # small shapes: batch=2, C_in=4, D=8, H=W=16, C_out=8, kernel 3x3x3, stride 1
    N, C_in, D, H, W = 2, 4, 8, 16, 16
    C_out = 8
    ksize = (3, 3, 3)
    stride = (1, 1, 1)

    x = jax.random.normal(k_x, (N, C_in, D, H, W), dtype=jnp.float32)
    weight = jax.random.normal(k_w, (C_out, C_in) + ksize, dtype=jnp.float32) * 0.1
    gamma = 0.5 + jax.random.uniform(k_g, (C_out,), dtype=jnp.float32)
    beta = jax.random.normal(k_b, (C_out,), dtype=jnp.float32) * 0.1
    running_mean = jax.random.normal(k_m, (C_out,), dtype=jnp.float32) * 0.1
    running_var = 0.5 + jax.random.uniform(k_v, (C_out,), dtype=jnp.float32)

    out = conv3d_block(x, weight, gamma, beta, running_mean, running_var,
                       stride=stride, eps=1e-3)
    out = jax.block_until_ready(out)

    ref = _reference(x, weight, gamma, beta, running_mean, running_var,
                     stride=stride, eps=1e-3)
    assert out.shape == ref.shape, (out.shape, ref.shape)
    # bf16 MXU inputs (f32 accumulation) -> slightly relaxed tolerance vs f32 ref.
    assert jnp.allclose(out, ref, atol=5e-2, rtol=5e-2), float(
        jnp.max(jnp.abs(out - ref)))

    print("KERNEL_OK")
</pallas_src>

<mosaic_0001>
module attributes {stable_mosaic.version = 11 : i64} {
  func.func @_conv_bn_relu_kernel(%arg0: i32, %arg1: memref<1x10x18x72xbf16, #tpu.memory_space<vmem>>, %arg2: memref<648x128xbf16, #tpu.memory_space<vmem>>, %arg3: memref<1x128xf32, #tpu.memory_space<vmem>>, %arg4: memref<1x8x16x128xf32, #tpu.memory_space<vmem>>, %arg5: memref<128x648xbf16, #tpu.memory_space<vmem>>) attributes {dimension_semantics = [#tpu.dimension_semantics<parallel>], iteration_bounds = array<i64: 2>, scalar_prefetch = 0 : i64, scratch_operands = 1 : i64, tpu.core_type = #tpu.core_type<tc>, window_params = [{transform_indices = @transform_0, window_bounds = array<i64: 1, 10, 18, 72>}, {pipeline_mode = #tpu.pipeline_mode<synchronous>, transform_indices = @transform_1, window_bounds = array<i64: 648, 128>}, {pipeline_mode = #tpu.pipeline_mode<synchronous>, transform_indices = @transform_2, window_bounds = array<i64: 1, 128>}, {transform_indices = @transform_3, window_bounds = array<i64: 1, 8, 16, 128>}]} {
    %c0 = arith.constant 0 : index
    %c0_0 = arith.constant 0 : index
    %c0_1 = arith.constant 0 : index
    %c0_2 = arith.constant 0 : index
    %0 = vector.load %arg1[%c0, %c0_0, %c0_1, %c0_2] : memref<1x10x18x72xbf16, #tpu.memory_space<vmem>>, vector<1x8x16x72xbf16>
    %1 = vector.shape_cast %0 : vector<1x8x16x72xbf16> to vector<8x16x72xbf16>
    %2 = vector.shape_cast %1 : vector<8x16x72xbf16> to vector<128x72xbf16>
    %c0_3 = arith.constant 0 : index
    %c0_4 = arith.constant 0 : index
    %3 = vector.load %arg5[%c0_3, %c0_4] : memref<128x648xbf16, #tpu.memory_space<vmem>>, vector<128x72xbf16>
    tpu.vector_store %arg5[%c0_3, %c0_4], %2 {strides = array<i32>} : memref<128x648xbf16, #tpu.memory_space<vmem>>, vector<128x72xbf16>,
    %c0_5 = arith.constant 0 : index
    %c0_6 = arith.constant 0 : index
    %c1 = arith.constant 1 : index
    %c0_7 = arith.constant 0 : index
    %4 = vector.load %arg1[%c0_5, %c0_6, %c1, %c0_7] : memref<1x10x18x72xbf16, #tpu.memory_space<vmem>>, vector<1x8x16x72xbf16>
    %5 = vector.shape_cast %4 : vector<1x8x16x72xbf16> to vector<8x16x72xbf16>
    %6 = vector.shape_cast %5 : vector<8x16x72xbf16> to vector<128x72xbf16>
    %c0_8 = arith.constant 0 : index
    %c72 = arith.constant 72 : index
    %7 = vector.load %arg5[%c0_8, %c72] : memref<128x648xbf16, #tpu.memory_space<vmem>>, vector<128x72xbf16>
    tpu.vector_store %arg5[%c0_8, %c72], %6 {strides = array<i32>} : memref<128x648xbf16, #tpu.memory_space<vmem>>, vector<128x72xbf16>,
    %c0_9 = arith.constant 0 : index
    %c0_10 = arith.constant 0 : index
    %c2 = arith.constant 2 : index
    %c0_11 = arith.constant 0 : index
    %8 = vector.load %arg1[%c0_9, %c0_10, %c2, %c0_11] : memref<1x10x18x72xbf16, #tpu.memory_space<vmem>>, vector<1x8x16x72xbf16>
    %9 = vector.shape_cast %8 : vector<1x8x16x72xbf16> to vector<8x16x72xbf16>
    %10 = vector.shape_cast %9 : vector<8x16x72xbf16> to vector<128x72xbf16>
    %c0_12 = arith.constant 0 : index
    %c144 = arith.constant 144 : index
    %11 = vector.load %arg5[%c0_12, %c144] : memref<128x648xbf16, #tpu.memory_space<vmem>>, vector<128x72xbf16>
    tpu.vector_store %arg5[%c0_12, %c144], %10 {strides = array<i32>} : memref<128x648xbf16, #tpu.memory_space<vmem>>, vector<128x72xbf16>,
    %c0_13 = arith.constant 0 : index
    %c1_14 = arith.constant 1 : index
    %c0_15 = arith.constant 0 : index
    %c0_16 = arith.constant 0 : index
    %12 = vector.load %arg1[%c0_13, %c1_14, %c0_15, %c0_16] : memref<1x10x18x72xbf16, #tpu.memory_space<vmem>>, vector<1x8x16x72xbf16>
    %13 = vector.shape_cast %12 : vector<1x8x16x72xbf16> to vector<8x16x72xbf16>
    %14 = vector.shape_cast %13 : vector<8x16x72xbf16> to vector<128x72xbf16>
    %c0_17 = arith.constant 0 : index
    %c216 = arith.constant 216 : index
    %15 = vector.load %arg5[%c0_17, %c216] : memref<128x648xbf16, #tpu.memory_space<vmem>>, vector<128x72xbf16>
    tpu.vector_store %arg5[%c0_17, %c216], %14 {strides = array<i32>} : memref<128x648xbf16, #tpu.memory_space<vmem>>, vector<128x72xbf16>,
    %c0_18 = arith.constant 0 : index
    %c1_19 = arith.constant 1 : index
    %c1_20 = arith.constant 1 : index
    %c0_21 = arith.constant 0 : index
    %16 = vector.load %arg1[%c0_18, %c1_19, %c1_20, %c0_21] : memref<1x10x18x72xbf16, #tpu.memory_space<vmem>>, vector<1x8x16x72xbf16>
    %17 = vector.shape_cast %16 : vector<1x8x16x72xbf16> to vector<8x16x72xbf16>
    %18 = vector.shape_cast %17 : vector<8x16x72xbf16> to vector<128x72xbf16>
    %c0_22 = arith.constant 0 : index
    %c288 = arith.constant 288 : index
    %19 = vector.load %arg5[%c0_22, %c288] : memref<128x648xbf16, #tpu.memory_space<vmem>>, vector<128x72xbf16>
    tpu.vector_store %arg5[%c0_22, %c288], %18 {strides = array<i32>} : memref<128x648xbf16, #tpu.memory_space<vmem>>, vector<128x72xbf16>,
    %c0_23 = arith.constant 0 : index
    %c1_24 = arith.constant 1 : index
    %c2_25 = arith.constant 2 : index
    %c0_26 = arith.constant 0 : index
    %20 = vector.load %arg1[%c0_23, %c1_24, %c2_25, %c0_26] : memref<1x10x18x72xbf16, #tpu.memory_space<vmem>>, vector<1x8x16x72xbf16>
    %21 = vector.shape_cast %20 : vector<1x8x16x72xbf16> to vector<8x16x72xbf16>
    %22 = vector.shape_cast %21 : vector<8x16x72xbf16> to vector<128x72xbf16>
    %c0_27 = arith.constant 0 : index
    %c360 = arith.constant 360 : index
    %23 = vector.load %arg5[%c0_27, %c360] : memref<128x648xbf16, #tpu.memory_space<vmem>>, vector<128x72xbf16>
    tpu.vector_store %arg5[%c0_27, %c360], %22 {strides = array<i32>} : memref<128x648xbf16, #tpu.memory_space<vmem>>, vector<128x72xbf16>,
    %c0_28 = arith.constant 0 : index
    %c2_29 = arith.constant 2 : index
    %c0_30 = arith.constant 0 : index
    %c0_31 = arith.constant 0 : index
    %24 = vector.load %arg1[%c0_28, %c2_29, %c0_30, %c0_31] : memref<1x10x18x72xbf16, #tpu.memory_space<vmem>>, vector<1x8x16x72xbf16>
    %25 = vector.shape_cast %24 : vector<1x8x16x72xbf16> to vector<8x16x72xbf16>
    %26 = vector.shape_cast %25 : vector<8x16x72xbf16> to vector<128x72xbf16>
    %c0_32 = arith.constant 0 : index
    %c432 = arith.constant 432 : index
    %27 = vector.load %arg5[%c0_32, %c432] : memref<128x648xbf16, #tpu.memory_space<vmem>>, vector<128x72xbf16>
    tpu.vector_store %arg5[%c0_32, %c432], %26 {strides = array<i32>} : memref<128x648xbf16, #tpu.memory_space<vmem>>, vector<128x72xbf16>,
    %c0_33 = arith.constant 0 : index
    %c2_34 = arith.constant 2 : index
    %c1_35 = arith.constant 1 : index
    %c0_36 = arith.constant 0 : index
    %28 = vector.load %arg1[%c0_33, %c2_34, %c1_35, %c0_36] : memref<1x10x18x72xbf16, #tpu.memory_space<vmem>>, vector<1x8x16x72xbf16>
    %29 = vector.shape_cast %28 : vector<1x8x16x72xbf16> to vector<8x16x72xbf16>
    %30 = vector.shape_cast %29 : vector<8x16x72xbf16> to vector<128x72xbf16>
    %c0_37 = arith.constant 0 : index
    %c504 = arith.constant 504 : index
    %31 = vector.load %arg5[%c0_37, %c504] : memref<128x648xbf16, #tpu.memory_space<vmem>>, vector<128x72xbf16>
    tpu.vector_store %arg5[%c0_37, %c504], %30 {strides = array<i32>} : memref<128x648xbf16, #tpu.memory_space<vmem>>, vector<128x72xbf16>,
    %c0_38 = arith.constant 0 : index
    %c2_39 = arith.constant 2 : index
    %c2_40 = arith.constant 2 : index
    %c0_41 = arith.constant 0 : index
    %32 = vector.load %arg1[%c0_38, %c2_39, %c2_40, %c0_41] : memref<1x10x18x72xbf16, #tpu.memory_space<vmem>>, vector<1x8x16x72xbf16>
    %33 = vector.shape_cast %32 : vector<1x8x16x72xbf16> to vector<8x16x72xbf16>
    %34 = vector.shape_cast %33 : vector<8x16x72xbf16> to vector<128x72xbf16>
    %c0_42 = arith.constant 0 : index
    %c576 = arith.constant 576 : index
    %35 = vector.load %arg5[%c0_42, %c576] : memref<128x648xbf16, #tpu.memory_space<vmem>>, vector<128x72xbf16>
    tpu.vector_store %arg5[%c0_42, %c576], %34 {strides = array<i32>} : memref<128x648xbf16, #tpu.memory_space<vmem>>, vector<128x72xbf16>,
    %c0_43 = arith.constant 0 : index
    %c0_44 = arith.constant 0 : index
    %36 = vector.load %arg5[%c0_43, %c0_44] : memref<128x648xbf16, #tpu.memory_space<vmem>>, vector<128x648xbf16>
    %c0_45 = arith.constant 0 : index
    %c0_46 = arith.constant 0 : index
    %37 = vector.load %arg2[%c0_45, %c0_46] : memref<648x128xbf16, #tpu.memory_space<vmem>>, vector<648x128xbf16>
    %cst = arith.constant dense<0.000000e+00> : vector<128x128xf32>
    %38 = tpu.matmul %36, %37, %cst {dimension_numbers = #tpu.dot_dimension_numbers<[1], [0], [0], [1], [0, 0, 1, 1], [], []>} : vector<128x648xbf16>, vector<648x128xbf16>, vector<128x128xf32> -> vector<128x128xf32>
    %c0_47 = arith.constant 0 : index
    %c0_48 = arith.constant 0 : index
    %39 = vector.load %arg3[%c0_47, %c0_48] : memref<1x128xf32, #tpu.memory_space<vmem>>, vector<1x128xf32>
    %40 = vector.broadcast %39 : vector<1x128xf32> to vector<128x128xf32>
    %41 = arith.addf %38, %40 : vector<128x128xf32>
    %cst_49 = arith.constant 0.000000e+00 : f32
    %42 = vector.broadcast %cst_49 : f32 to vector<128x128xf32>
    %43 = arith.maximumf %41, %42 : vector<128x128xf32>
    %44 = vector.shape_cast %43 : vector<128x128xf32> to vector<8x16x128xf32>
    %c0_50 = arith.constant 0 : index
    %c0_51 = arith.constant 0 : index
    %c0_52 = arith.constant 0 : index
    %c0_53 = arith.constant 0 : index
    %45 = vector.load %arg4[%c0_50, %c0_51, %c0_52, %c0_53] : memref<1x8x16x128xf32, #tpu.memory_space<vmem>>, vector<1x8x16x128xf32>
    %46 = vector.shape_cast %45 : vector<1x8x16x128xf32> to vector<8x16x128xf32>
    %47 = vector.shape_cast %44 : vector<8x16x128xf32> to vector<1x8x16x128xf32>
    tpu.vector_store %arg4[%c0_50, %c0_51, %c0_52, %c0_53], %47 {strides = array<i32>} : memref<1x8x16x128xf32, #tpu.memory_space<vmem>>, vector<1x8x16x128xf32>,
    return
  }
  func.func @transform_0(%arg0: i32) -> (i32, i32, i32, i32) {
    %c0_i32 = arith.constant 0 : i32
    %c0_i32_0 = arith.constant 0 : i32
    %c0_i32_1 = arith.constant 0 : i32
    %c0_i32_2 = arith.constant 0 : i32
    return %arg0, %c0_i32, %c0_i32_0, %c0_i32_1 : i32, i32, i32, i32
  }
  func.func @transform_1(%arg0: i32) -> (i32, i32) {
    %c0_i32 = arith.constant 0 : i32
    %c0_i32_0 = arith.constant 0 : i32
    %c0_i32_1 = arith.constant 0 : i32
    return %c0_i32, %c0_i32_0 : i32, i32
  }
  func.func @transform_2(%arg0: i32) -> (i32, i32) {
    %c0_i32 = arith.constant 0 : i32
    %c0_i32_0 = arith.constant 0 : i32
    %c0_i32_1 = arith.constant 0 : i32
    return %c0_i32, %c0_i32_0 : i32, i32
  }
  func.func @transform_3(%arg0: i32) -> (i32, i32, i32, i32) {
    %c0_i32 = arith.constant 0 : i32
    %c0_i32_0 = arith.constant 0 : i32
    %c0_i32_1 = arith.constant 0 : i32
    %c0_i32_2 = arith.constant 0 : i32
    return %arg0, %c0_i32, %c0_i32_0, %c0_i32_1 : i32, i32, i32, i32
  }
}

</mosaic_0001>

<llo_original>
// kernel: tpu_custom_call.1
$region0: #{tpu_custom_call.1}
  #allocation0 [shape = 'u32[]', space=smem, size = 0x4, offset = 0x4, fixed_abs, tag = 'smem constant byte address 0x4 - core index']
  #allocation1 [shape = 'u32[144,128]{1,0:T(1,128)}', space=vmem, size = 0x12000, scoped, tag = 'internal scratch']
  #allocation2 [shape = 'bf16[128,648]{1,0:T(16,128)(2,1)}', space=vmem, size = 0x30000, scoped, tag = 'scratch operand']
  %s0 = inlined_call_operand.vmem [shape: bf16[2,10,18,72], index: 0, kind: input, shape index: {}]
  %s1 = inlined_call_operand.vmem [shape: bf16[648,128], index: 1, kind: input, shape index: {}]
  %s2 = inlined_call_operand.vmem [shape: f32[1,128], index: 2, kind: input, shape index: {}]
  %s3 = inlined_call_operand.hbm [shape: f32[2,8,16,128], index: 3, kind: output, shape index: {}]
  %s4 = sld [smem:[#allocation0]]
  $region45: #{tpu_custom_call.1} parent=0
    _
  %s6 = ssub.s32 1, %s4
  %s7 = scalar_select 0, %s6, %s4
  $region1: #{tpu_custom_call.1} parent=0
    #allocation3 [shape = 'u8[131072]{0}', space=vmem, size = 0x20000, scoped, tag = 'output window, operand 0']
    #allocation4 [shape = 's32[2]{0}', space=sflag, size = 0x8, scoped, tag = 'scoped memory for tpu_custom_call.1']
    %8 = vsyncpa [#allocation4], 0
    %s9 = scalar_lea.sflag [#allocation4], 1
    %10 = vsyncpa %s9, 0
    loop: start=0, step=1, limit=4
    $region2: #{tpu_custom_call.1} parent=1 // loop_pre_header
      _
    $region3: #{tpu_custom_call.1} parent=1 // loop_header
      %s12 = sphi 0, %s16
      %p13 = scmp.ge.s32.totalorder %s12, 4
      %s22 = sphi 0, %s24
      %s25 = sphi 0, %s22
      %s26 = sphi 0, %s25
      %s42 = sphi 0, %s26
      %s46 = sphi 0, %s46
      %s48 = sphi 0, %s46
      %s49 = sphi 0, %s48
      %s63 = sphi 0, %s49
      %s67 = sphi 0, %s67
      %s69 = sphi 0, %s67
      %s70 = sphi 0, %s69
      %s84 = sphi 0, %s70
      %s90 = sphi 0, %s92
      %s93 = sphi 0, %s90
      %s94 = sphi 0, %s93
      %s110 = sphi 0, %s94
    $region4: #{tpu_custom_call.1} parent=1 // loop_header_branch
      %15 = sbr.rel (%p13) target = $region8
    $region5: #{tpu_custom_call.1} parent=1 // loop_body
      %s17 = ssub.s32 %s12, 1
      %s18 = ssub.s32 %s12, 2
      %s19 = sadd.s32 %s12, 1
      %s20 = ssub.s32 %s12, %s19
      %p21 = scmp.eq.s32.totalorder %s20, 0
      %s23 = sadd.s32 %s22, 1
      %s24 = scalar_select %p21, %s22, %s23
      %p27 = pneg %p21
      %p28 = scmp.eq.s32.totalorder %s12, 1
      %p29 = por %p27, %p28
      %p30 = scmp.ne.s32.totalorder %s22, %s25
      %p31 = scmp.eq.s32.totalorder %s12, 0
      %p32 = por %p30, %p31
      %p33 = scmp.ne.s32.totalorder %s22, %s25
      %p34 = scmp.eq.s32.totalorder %s17, 1
      %p35 = por %p33, %p34
      %p36 = scmp.ne.s32.totalorder %s25, %s26
      %p37 = scmp.eq.s32.totalorder %s17, 0
      %p38 = por %p36, %p37
      %p39 = scmp.ne.s32.totalorder %s25, %s26
      %p40 = scmp.eq.s32.totalorder %s18, 1
      %p41 = por %p39, %p40
      %p43 = scmp.ne.s32.totalorder %s26, %s42
      %p44 = scmp.eq.s32.totalorder %s18, 0
      %p45 = por %p43, %p44
      %s47 = sadd.s32 %s46, 1
      %p50 = scmp.eq.s32.totalorder %s12, 1
      %p51 = scmp.ne.s32.totalorder %s46, %s48
      %p52 = scmp.eq.s32.totalorder %s12, 0
      %p53 = por %p51, %p52
      %p54 = scmp.ne.s32.totalorder %s46, %s48
      %p55 = scmp.eq.s32.totalorder %s17, 1
      %p56 = por %p54, %p55
      %p57 = scmp.ne.s32.totalorder %s48, %s49
      %p58 = scmp.eq.s32.totalorder %s17, 0
      %p59 = por %p57, %p58
      %p60 = scmp.ne.s32.totalorder %s48, %s49
      %p61 = scmp.eq.s32.totalorder %s18, 1
      %p62 = por %p60, %p61
      %p64 = scmp.ne.s32.totalorder %s49, %s63
      %p65 = scmp.eq.s32.totalorder %s18, 0
      %p66 = por %p64, %p65
      %s68 = sadd.s32 %s67, 1
      %p71 = scmp.eq.s32.totalorder %s12, 1
      %p72 = scmp.ne.s32.totalorder %s67, %s69
      %p73 = scmp.eq.s32.totalorder %s12, 0
      %p74 = por %p72, %p73
      %p75 = scmp.ne.s32.totalorder %s67, %s69
      %p76 = scmp.eq.s32.totalorder %s17, 1
      %p77 = por %p75, %p76
      %p78 = scmp.ne.s32.totalorder %s69, %s70
      %p79 = scmp.eq.s32.totalorder %s17, 0
      %p80 = por %p78, %p79
      %p81 = scmp.ne.s32.totalorder %s69, %s70
      %p82 = scmp.eq.s32.totalorder %s18, 1
      %p83 = por %p81, %p82
      %p85 = scmp.ne.s32.totalorder %s70, %s84
      %p86 = scmp.eq.s32.totalorder %s18, 0
      %p87 = por %p85, %p86
      %s88 = ssub.s32 %s12, %s19
      %p89 = scmp.eq.s32.totalorder %s88, 0
      %s91 = sadd.s32 %s90, 1
      %s92 = scalar_select %p89, %s90, %s91
      %p95 = pneg %p89
      %p96 = scmp.eq.s32.totalorder %s12, 1
      %p97 = por %p95, %p96
      %p98 = scmp.ne.s32.totalorder %s90, %s93
      %p99 = scmp.eq.s32.totalorder %s12, 0
      %p100 = por %p98, %p99
      %p101 = scmp.ne.s32.totalorder %s90, %s93
      %p102 = scmp.eq.s32.totalorder %s17, 1
      %p103 = por %p101, %p102
      %p104 = scmp.ne.s32.totalorder %s93, %s94
      %p105 = scmp.eq.s32.totalorder %s17, 0
      %p106 = por %p104, %p105
      %p107 = scmp.ne.s32.totalorder %s93, %s94
      %p108 = scmp.eq.s32.totalorder %s18, 1
      %p109 = por %p107, %p108
      %p111 = scmp.ne.s32.totalorder %s94, %s110
      %p112 = scmp.eq.s32.totalorder %s18, 0
      %p113 = por %p111, %p112
      %p114 = scmp.le.s32.totalorder 1, %s12
      %p115 = scmp.lt.s32.totalorder %s12, 3
      %p116 = pnand %p114, %p115
      %p117 = pneg %p116
      // Predicated region
      $region9: #{tpu_custom_call.1} parent=5 // pred_check
        _
      $region10: #{tpu_custom_call.1} parent=5 // pred_check_branch
        %119 = sbr.rel (%p116) target = $region12
      $region11: #{tpu_custom_call.1} parent=5 // pred_region
        %s120 = ssub.s32 %s12, 1
        // Predicated region
        $region13: #{tpu_custom_call.1} parent=11 // pred_check
          %p121 = pneg %p59
        $region14: #{tpu_custom_call.1} parent=11 // pred_check_branch
          %123 = sbr.rel (%p121) target = $region16
        $region15: #{tpu_custom_call.1} parent=11 // pred_region
          _
        $region16: #{tpu_custom_call.1} parent=11 // pred_fallthru
          _
        // Predicated region
        $region17: #{tpu_custom_call.1} parent=11 // pred_check
          %p124 = pneg %p80
        $region18: #{tpu_custom_call.1} parent=11 // pred_check_branch
          %126 = sbr.rel (%p124) target = $region20
        $region19: #{tpu_custom_call.1} parent=11 // pred_region
          _
        $region20: #{tpu_custom_call.1} parent=11 // pred_fallthru
          _
      $region12: #{tpu_custom_call.1} parent=5 // pred_fallthru
        _
      %p127 = scmp.lt.s32.totalorder %s12, 2
      // Predicated region
      $region21: #{tpu_custom_call.1} parent=5 // pred_check
        %p128 = pneg %p127
      $region22: #{tpu_custom_call.1} parent=5 // pred_check_branch
        %130 = sbr.rel (%p128) target = $region24
      $region23: #{tpu_custom_call.1} parent=5 // pred_region
        // Predicated region
        $region25: #{tpu_custom_call.1} parent=23 // pred_check
          %p131 = pneg %p32
        $region26: #{tpu_custom_call.1} parent=23 // pred_check_branch
          %133 = sbr.rel (%p131) target = $region28
        $region27: #{tpu_custom_call.1} parent=23 // pred_region
          %p134 = scmp.lt.s32.totalorder %s12, 1
          %s135 = scalar_select %p134, %s12, 1
          %s136 = smul.addr %s135, 30
          %s137 = smul.addr %s136, 4
          %s138 = scalar_lea.vmem %s0, %s137
        $region28: #{tpu_custom_call.1} parent=23 // pred_fallthru
          _
      $region24: #{tpu_custom_call.1} parent=5 // pred_fallthru
        _
      %p139 = scmp.le.s32.totalorder 1, %s12
      %p140 = scmp.lt.s32.totalorder %s12, 3
      %p141 = pnand %p139, %p140
      %p142 = pneg %p141
      // Predicated region
      $region29: #{tpu_custom_call.1} parent=5 // pred_check
        _
      $region30: #{tpu_custom_call.1} parent=5 // pred_check_branch
        %144 = sbr.rel (%p141) target = $region32
      $region31: #{tpu_custom_call.1} parent=5 // pred_region
        %s145 = ssub.s32 %s12, 1
        %p146 = scmp.lt.s32.totalorder %s17, 1
        %s147 = scalar_select %p146, %s17, 1
        %s148 = smul.addr %s147, 30
        %s149 = smul.addr %s148, 4
        %s150 = scalar_lea.vmem %s0, %s149
        %p151 = pneg %p38
        %p152 = pneg %p35
        %p153 = pneg %p59
        %p154 = pneg %p56
        %p155 = pneg %p80
        %p156 = pneg %p77
        %p157 = pneg %p106
        %p158 = pneg %p103
        %s159 = sand.u32 %s93, 1
        %s160 = scalar_lea.sflag [#allocation4], %s159
        %s161 = sand.u32 %s93, 1
        %s162 = smul.addr %s161, 128
        %s163 = scalar_lea.vmem [#allocation3], %s162
        %p164 = scmp.lt.s32.totalorder %s17, 1
        %s165 = scalar_select %p164, %s17, 1
        %s166 = smul.addr %s165, 30
        %s167 = smul.addr %s166, 4
        %s168 = scalar_lea.vmem %s0, %s167
        %v170 = vld [vmem:[%s168] sm:$0xf]
        %v171 = vld [vmem:[%s168 + $0x4] sm:$0xf]
        %v172 = vld [vmem:[%s168 + $0xc] sm:$0xf]
        %v173 = vld [vmem:[%s168 + $0x10] sm:$0xf]
        %v174 = vld [vmem:[%s168 + $0x18] sm:$0xf]
        %v175 = vld [vmem:[%s168 + $0x1c] sm:$0xf]
        %v176 = vld [vmem:[%s168 + $0x24] sm:$0xf]
        %v177 = vld [vmem:[%s168 + $0x28] sm:$0xf]
        %v178 = vld [vmem:[%s168 + $0x30] sm:$0xf]
        %v179 = vld [vmem:[%s168 + $0x34] sm:$0xf]
        %v180 = vld [vmem:[%s168 + $0x3c] sm:$0xf]
        %v181 = vld [vmem:[%s168 + $0x40] sm:$0xf]
        %v182 = vld [vmem:[%s168 + $0x48] sm:$0xf]
        %v183 = vld [vmem:[%s168 + $0x4c] sm:$0xf]
        %v184 = vld [vmem:[%s168 + $0x54] sm:$0xf]
        %v185 = vld [vmem:[%s168 + $0x58] sm:$0xf]
        %v202 = vunpack.c.l.b16 %v170
        %v203 = vunpack.c.l.b16 %v171
        %v204 = vunpack.c.l.b16 %v172
        %v205 = vunpack.c.l.b16 %v173
        %v206 = vunpack.c.l.b16 %v174
        %v207 = vunpack.c.l.b16 %v175
        %v208 = vunpack.c.l.b16 %v176
        %v209 = vunpack.c.l.b16 %v177
        %v210 = vunpack.c.l.b16 %v178
        %v211 = vunpack.c.l.b16 %v179
        %v212 = vunpack.c.l.b16 %v180
        %v213 = vunpack.c.l.b16 %v181
        %v214 = vunpack.c.l.b16 %v182
        %v215 = vunpack.c.l.b16 %v183
        %v216 = vunpack.c.l.b16 %v184
        %v217 = vunpack.c.l.b16 %v185
        %v218 = vpack.c.b16 %v203, %v202
        %v219 = vpack.c.b16 %v205, %v204
        %v220 = vpack.c.b16 %v207, %v206
        %v221 = vpack.c.b16 %v209, %v208
        %v222 = vpack.c.b16 %v211, %v210
        %v223 = vpack.c.b16 %v213, %v212
        %v224 = vpack.c.b16 %v215, %v214
        %v225 = vpack.c.b16 %v217, %v216
        %vm234 = vcmask 588800
        %235 = vst.msk [vmem:[#allocation2] sm:$0xff] %vm234, %v218
        %236 = vst.msk [vmem:[#allocation2 + $0x30] sm:$0xff] %vm234, %v219
        %237 = vst.msk [vmem:[#allocation2 + $0x60] sm:$0xff] %vm234, %v220
        %238 = vst.msk [vmem:[#allocation2 + $0x90] sm:$0xff] %vm234, %v221
        %239 = vst.msk [vmem:[#allocation2 + $0xc0] sm:$0xff] %vm234, %v222
        %240 = vst.msk [vmem:[#allocation2 + $0xf0] sm:$0xff] %vm234, %v223
        %241 = vst.msk [vmem:[#allocation2 + $0x120] sm:$0xff] %vm234, %v224
        %242 = vst.msk [vmem:[#allocation2 + $0x150] sm:$0xff] %vm234, %v225
        %v243 = vld [vmem:[%s168] sm:$0xf]
        %v244 = vld [vmem:[%s168 + $0x4] sm:$0xf]
        %v245 = vld [vmem:[%s168 + $0x8] sm:$0x1]
        %v246 = vld [vmem:[%s168 + $0xc] sm:$0xf]
        %v247 = vld [vmem:[%s168 + $0x10] sm:$0xf]
        %v248 = vld [vmem:[%s168 + $0x14] sm:$0x1]
        %v249 = vld [vmem:[%s168 + $0x18] sm:$0xf]
        %v250 = vld [vmem:[%s168 + $0x1c] sm:$0xf]
        %v251 = vld [vmem:[%s168 + $0x20] sm:$0x1]
        %v252 = vld [vmem:[%s168 + $0x24] sm:$0xf]
        %v253 = vld [vmem:[%s168 + $0x28] sm:$0xf]
        %v254 = vld [vmem:[%s168 + $0x2c] sm:$0x1]
        %v255 = vld [vmem:[%s168 + $0x30] sm:$0xf]
        %v256 = vld [vmem:[%s168 + $0x34] sm:$0xf]
        %v257 = vld [vmem:[%s168 + $0x38] sm:$0x1]
        %v258 = vld [vmem:[%s168 + $0x3c] sm:$0xf]
        %v259 = vld [vmem:[%s168 + $0x40] sm:$0xf]
        %v260 = vld [vmem:[%s168 + $0x44] sm:$0x1]
        %v261 = vld [vmem:[%s168 + $0x48] sm:$0xf]
        %v262 = vld [vmem:[%s168 + $0x4c] sm:$0xf]
        %v263 = vld [vmem:[%s168 + $0x50] sm:$0x1]
        %v264 = vld [vmem:[%s168 + $0x54] sm:$0xf]
        %v265 = vld [vmem:[%s168 + $0x58] sm:$0xf]
        %v266 = vld [vmem:[%s168 + $0x5c] sm:$0x1]
        %vm267 = vsmask.f32 3328
        %vm268 = vsmask.f32 7440
        %vm269 = vmor %vm267, %vm268
        %v271 = vshrl.u32 %v243, 16
        %v273 = vrot.slane %v271, 4
        %v274 = vshll.u32 %v243, 16
        %v276 = vrot.slane %v274, 5
        %v277 = vor.u32 %v273, %v276
        %v278 = vrot.slane %v277, 4
        %v280 = vshll.u32 %v244, 16
        %v282 = vrot.slane %v280, 5
        %v283 = vsel %vm269, %v278, %v282
        %v284 = vshrl.u32 %v244, 16
        %v286 = vrot.slane %v284, 4
        %v287 = vor.u32 %v286, %v282
        %v288 = vrot.slane %v287, 4
        %v290 = vshll.u32 %v245, 16
        %v292 = vrot.slane %v290, 5
        %v293 = vsel %vm269, %v288, %v292
        %v295 = vshrl.u32 %v246, 16
        %v297 = vrot.slane %v295, 4
        %v298 = vshll.u32 %v246, 16
        %v300 = vrot.slane %v298, 5
        %v301 = vor.u32 %v297, %v300
        %v302 = vrot.slane %v301, 4
        %v304 = vshll.u32 %v247, 16
        %v306 = vrot.slane %v304, 5
        %v307 = vsel %vm269, %v302, %v306
        %v308 = vshrl.u32 %v247, 16
        %v310 = vrot.slane %v308, 4
        %v311 = vor.u32 %v310, %v306
        %v312 = vrot.slane %v311, 4
        %v314 = vshll.u32 %v248, 16
        %v316 = vrot.slane %v314, 5
        %v317 = vsel %vm269, %v312, %v316
        %v319 = vshrl.u32 %v249, 16
        %v321 = vrot.slane %v319, 4
        %v322 = vshll.u32 %v249, 16
        %v324 = vrot.slane %v322, 5
        %v325 = vor.u32 %v321, %v324
        %v326 = vrot.slane %v325, 4
        %v328 = vshll.u32 %v250, 16
        %v330 = vrot.slane %v328, 5
        %v331 = vsel %vm269, %v326, %v330
        %v332 = vshrl.u32 %v250, 16
        %v334 = vrot.slane %v332, 4
        %v335 = vor.u32 %v334, %v330
        %v336 = vrot.slane %v335, 4
        %v338 = vshll.u32 %v251, 16
        %v340 = vrot.slane %v338, 5
        %v341 = vsel %vm269, %v336, %v340
        %v343 = vshrl.u32 %v252, 16
        %v345 = vrot.slane %v343, 4
        %v346 = vshll.u32 %v252, 16
        %v348 = vrot.slane %v346, 5
        %v349 = vor.u32 %v345, %v348
        %v350 = vrot.slane %v349, 4
        %v352 = vshll.u32 %v253, 16
        %v354 = vrot.slane %v352, 5
        %v355 = vsel %vm269, %v350, %v354
        %v356 = vshrl.u32 %v253, 16
        %v358 = vrot.slane %v356, 4
        %v359 = vor.u32 %v358, %v354
        %v360 = vrot.slane %v359, 4
        %v362 = vshll.u32 %v254, 16
        %v364 = vrot.slane %v362, 5
        %v365 = vsel %vm269, %v360, %v364
        %v367 = vshrl.u32 %v255, 16
        %v369 = vrot.slane %v367, 4
        %v370 = vshll.u32 %v255, 16
        %v372 = vrot.slane %v370, 5
        %v373 = vor.u32 %v369, %v372
        %v374 = vrot.slane %v373, 4
        %v376 = vshll.u32 %v256, 16
        %v378 = vrot.slane %v376, 5
        %v379 = vsel %vm269, %v374, %v378
        %v380 = vshrl.u32 %v256, 16
        %v382 = vrot.slane %v380, 4
        %v383 = vor.u32 %v382, %v378
        %v384 = vrot.slane %v383, 4
        %v386 = vshll.u32 %v257, 16
        %v388 = vrot.slane %v386, 5
        %v389 = vsel %vm269, %v384, %v388
        %v391 = vshrl.u32 %v258, 16
        %v393 = vrot.slane %v391, 4
        %v394 = vshll.u32 %v258, 16
        %v396 = vrot.slane %v394, 5
        %v397 = vor.u32 %v393, %v396
        %v398 = vrot.slane %v397, 4
        %v400 = vshll.u32 %v259, 16
        %v402 = vrot.slane %v400, 5
        %v403 = vsel %vm269, %v398, %v402
        %v404 = vshrl.u32 %v259, 16
        %v406 = vrot.slane %v404, 4
        %v407 = vor.u32 %v406, %v402
        %v408 = vrot.slane %v407, 4
        %v410 = vshll.u32 %v260, 16
        %v412 = vrot.slane %v410, 5
        %v413 = vsel %vm269, %v408, %v412
        %v415 = vshrl.u32 %v261, 16
        %v417 = vrot.slane %v415, 4
        %v418 = vshll.u32 %v261, 16
        %v420 = vrot.slane %v418, 5
        %v421 = vor.u32 %v417, %v420
        %v422 = vrot.slane %v421, 4
        %v424 = vshll.u32 %v262, 16
        %v426 = vrot.slane %v424, 5
        %v427 = vsel %vm269, %v422, %v426
        %v428 = vshrl.u32 %v262, 16
        %v430 = vrot.slane %v428, 4
        %v431 = vor.u32 %v430, %v426
        %v432 = vrot.slane %v431, 4
        %v434 = vshll.u32 %v263, 16
        %v436 = vrot.slane %v434, 5
        %v437 = vsel %vm269, %v432, %v436
        %v439 = vshrl.u32 %v264, 16
        %v441 = vrot.slane %v439, 4
        %v442 = vshll.u32 %v264, 16
        %v444 = vrot.slane %v442, 5
        %v445 = vor.u32 %v441, %v444
        %v446 = vrot.slane %v445, 4
        %v448 = vshll.u32 %v265, 16
        %v450 = vrot.slane %v448, 5
        %v451 = vsel %vm269, %v446, %v450
        %v452 = vshrl.u32 %v265, 16
        %v454 = vrot.slane %v452, 4
        %v455 = vor.u32 %v454, %v450
        %v456 = vrot.slane %v455, 4
        %v458 = vshll.u32 %v266, 16
        %v460 = vrot.slane %v458, 5
        %v461 = vsel %vm269, %v456, %v460
        %v462 = vunpack.c.l.b16 %v283
        %v463 = vunpack.c.l.b16 %v293
        %v464 = vunpack.c.l.b16 %v307
        %v465 = vunpack.c.l.b16 %v317
        %v466 = vunpack.c.l.b16 %v331
        %v467 = vunpack.c.l.b16 %v341
        %v468 = vunpack.c.l.b16 %v355
        %v469 = vunpack.c.l.b16 %v365
        %v470 = vunpack.c.l.b16 %v379
        %v471 = vunpack.c.l.b16 %v389
        %v472 = vunpack.c.l.b16 %v403
        %v473 = vunpack.c.l.b16 %v413
        %v474 = vunpack.c.l.b16 %v427
        %v475 = vunpack.c.l.b16 %v437
        %v476 = vunpack.c.l.b16 %v451
        %v477 = vunpack.c.l.b16 %v461
        %v478 = vpack.c.b16 %v463, %v462
        %v479 = vpack.c.b16 %v465, %v464
        %v480 = vpack.c.b16 %v467, %v466
        %v481 = vpack.c.b16 %v469, %v468
        %v482 = vpack.c.b16 %v471, %v470
        %v483 = vpack.c.b16 %v473, %v472
        %v484 = vpack.c.b16 %v475, %v474
        %v485 = vpack.c.b16 %v477, %v476
        %486 = vrot.lane.b32.xlu0 %v478, 72
        %v487 = vpop.permute.xlu0 %486
        %488 = vrot.lane.b32.xlu0 %v479, 72
        %v489 = vpop.permute.xlu0 %488
        %490 = vrot.lane.b32.xlu0 %v480, 72
        %v491 = vpop.permute.xlu0 %490
        %492 = vrot.lane.b32.xlu0 %v481, 72
        %v493 = vpop.permute.xlu0 %492
        %494 = vrot.lane.b32.xlu0 %v482, 72
        %v495 = vpop.permute.xlu0 %494
        %496 = vrot.lane.b32.xlu0 %v483, 72
        %v497 = vpop.permute.xlu0 %496
        %498 = vrot.lane.b32.xlu0 %v484, 72
        %v499 = vpop.permute.xlu0 %498
        %500 = vrot.lane.b32.xlu0 %v485, 72
        %v501 = vpop.permute.xlu0 %500
        %vm510 = vcmask 1048128
        %511 = vst.msk [vmem:[#allocation2] sm:$0xff] %vm510, %v487
        %vm512 = vcmask 130048
        %513 = vst.msk [vmem:[#allocation2 + $0x8] sm:$0xff] %vm512, %v487
        %514 = vst.msk [vmem:[#allocation2 + $0x30] sm:$0xff] %vm510, %v489
        %515 = vst.msk [vmem:[#allocation2 + $0x38] sm:$0xff] %vm512, %v489
        %516 = vst.msk [vmem:[#allocation2 + $0x60] sm:$0xff] %vm510, %v491
        %517 = vst.msk [vmem:[#allocation2 + $0x68] sm:$0xff] %vm512, %v491
        %518 = vst.msk [vmem:[#allocation2 + $0x90] sm:$0xff] %vm510, %v493
        %519 = vst.msk [vmem:[#allocation2 + $0x98] sm:$0xff] %vm512, %v493
        %520 = vst.msk [vmem:[#allocation2 + $0xc0] sm:$0xff] %vm510, %v495
        %521 = vst.msk [vmem:[#allocation2 + $0xc8] sm:$0xff] %vm512, %v495
        %522 = vst.msk [vmem:[#allocation2 + $0xf0] sm:$0xff] %vm510, %v497
        %523 = vst.msk [vmem:[#allocation2 + $0xf8] sm:$0xff] %vm512, %v497
        %524 = vst.msk [vmem:[#allocation2 + $0x120] sm:$0xff] %vm510, %v499
        %525 = vst.msk [vmem:[#allocation2 + $0x128] sm:$0xff] %vm512, %v499
        %526 = vst.msk [vmem:[#allocation2 + $0x150] sm:$0xff] %vm510, %v501
        %527 = vst.msk [vmem:[#allocation2 + $0x158] sm:$0xff] %vm512, %v501
        %v528 = vld [vmem:[%s168] sm:$0xe]
        %v529 = vld [vmem:[%s168 + $0x4] sm:$0xf]
        %v530 = vld [vmem:[%s168 + $0x8] sm:$0x1]
        %v531 = vld [vmem:[%s168 + $0xc] sm:$0xe]
        %v532 = vld [vmem:[%s168 + $0x10] sm:$0xf]
        %v533 = vld [vmem:[%s168 + $0x14] sm:$0x1]
        %v534 = vld [vmem:[%s168 + $0x18] sm:$0xe]
        %v535 = vld [vmem:[%s168 + $0x1c] sm:$0xf]
        %v536 = vld [vmem:[%s168 + $0x20] sm:$0x1]
        %v537 = vld [vmem:[%s168 + $0x24] sm:$0xe]
        %v538 = vld [vmem:[%s168 + $0x28] sm:$0xf]
        %v539 = vld [vmem:[%s168 + $0x2c] sm:$0x1]
        %v540 = vld [vmem:[%s168 + $0x30] sm:$0xe]
        %v541 = vld [vmem:[%s168 + $0x34] sm:$0xf]
        %v542 = vld [vmem:[%s168 + $0x38] sm:$0x1]
        %v543 = vld [vmem:[%s168 + $0x3c] sm:$0xe]
        %v544 = vld [vmem:[%s168 + $0x40] sm:$0xf]
        %v545 = vld [vmem:[%s168 + $0x44] sm:$0x1]
        %v546 = vld [vmem:[%s168 + $0x48] sm:$0xe]
        %v547 = vld [vmem:[%s168 + $0x4c] sm:$0xf]
        %v548 = vld [vmem:[%s168 + $0x50] sm:$0x1]
        %v549 = vld [vmem:[%s168 + $0x54] sm:$0xe]
        %v550 = vld [vmem:[%s168 + $0x58] sm:$0xf]
        %v551 = vld [vmem:[%s168 + $0x5c] sm:$0x1]
        %vm576 = vcmask 1042432
        %vm577 = vcmask 1046532
        %vm578 = vmor %vm576, %vm577
        %v579 = vrot.slane %v528, 5
        %v580 = vrot.slane %v579, 4
        %v581 = vrot.slane %v529, 5
        %v582 = vsel %vm578, %v580, %v581
        %v583 = vrot.slane %v581, 4
        %v584 = vrot.slane %v530, 5
        %v585 = vsel %vm578, %v583, %v584
        %v586 = vrot.slane %v531, 5
        %v587 = vrot.slane %v586, 4
        %v588 = vrot.slane %v532, 5
        %v589 = vsel %vm578, %v587, %v588
        %v590 = vrot.slane %v588, 4
        %v591 = vrot.slane %v533, 5
        %v592 = vsel %vm578, %v590, %v591
        %v593 = vrot.slane %v534, 5
        %v594 = vrot.slane %v593, 4
        %v595 = vrot.slane %v535, 5
        %v596 = vsel %vm578, %v594, %v595
        %v597 = vrot.slane %v595, 4
        %v598 = vrot.slane %v536, 5
        %v599 = vsel %vm578, %v597, %v598
        %v600 = vrot.slane %v537, 5
        %v601 = vrot.slane %v600, 4
        %v602 = vrot.slane %v538, 5
        %v603 = vsel %vm578, %v601, %v602
        %v604 = vrot.slane %v602, 4
        %v605 = vrot.slane %v539, 5
        %v606 = vsel %vm578, %v604, %v605
        %v607 = vrot.slane %v540, 5
        %v608 = vrot.slane %v607, 4
        %v609 = vrot.slane %v541, 5
        %v610 = vsel %vm578, %v608, %v609
        %v611 = vrot.slane %v609, 4
        %v612 = vrot.slane %v542, 5
        %v613 = vsel %vm578, %v611, %v612
        %v614 = vrot.slane %v543, 5
        %v615 = vrot.slane %v614, 4
        %v616 = vrot.slane %v544, 5
        %v617 = vsel %vm578, %v615, %v616
        %v618 = vrot.slane %v616, 4
        %v619 = vrot.slane %v545, 5
        %v620 = vsel %vm578, %v618, %v619
        %v621 = vrot.slane %v546, 5
        %v622 = vrot.slane %v621, 4
        %v623 = vrot.slane %v547, 5
        %v624 = vsel %vm578, %v622, %v623
        %v625 = vrot.slane %v623, 4
        %v626 = vrot.slane %v548, 5
        %v627 = vsel %vm578, %v625, %v626
        %v628 = vrot.slane %v549, 5
        %v629 = vrot.slane %v628, 4
        %v630 = vrot.slane %v550, 5
        %v631 = vsel %vm578, %v629, %v630
        %v632 = vrot.slane %v630, 4
        %v633 = vrot.slane %v551, 5
        %v634 = vsel %vm578, %v632, %v633
        %v635 = vunpack.c.l.b16 %v582
        %v636 = vunpack.c.l.b16 %v585
        %v637 = vunpack.c.l.b16 %v589
        %v638 = vunpack.c.l.b16 %v592
        %v639 = vunpack.c.l.b16 %v596
        %v640 = vunpack.c.l.b16 %v599
        %v641 = vunpack.c.l.b16 %v603
        %v642 = vunpack.c.l.b16 %v606
        %v643 = vunpack.c.l.b16 %v610
        %v644 = vunpack.c.l.b16 %v613
        %v645 = vunpack.c.l.b16 %v617
        %v646 = vunpack.c.l.b16 %v620
        %v647 = vunpack.c.l.b16 %v624
        %v648 = vunpack.c.l.b16 %v627
        %v649 = vunpack.c.l.b16 %v631
        %v650 = vunpack.c.l.b16 %v634
        %v651 = vpack.c.b16 %v636, %v635
        %v652 = vpack.c.b16 %v638, %v637
        %v653 = vpack.c.b16 %v640, %v639
        %v654 = vpack.c.b16 %v642, %v641
        %v655 = vpack.c.b16 %v644, %v643
        %v656 = vpack.c.b16 %v646, %v645
        %v657 = vpack.c.b16 %v648, %v647
        %v658 = vpack.c.b16 %v650, %v649
        %659 = vrot.lane.b32.xlu0 %v651, 16
        %v660 = vpop.permute.xlu0 %659
        %661 = vrot.lane.b32.xlu0 %v652, 16
        %v662 = vpop.permute.xlu0 %661
        %663 = vrot.lane.b32.xlu0 %v653, 16
        %v664 = vpop.permute.xlu0 %663
        %665 = vrot.lane.b32.xlu0 %v654, 16
        %v666 = vpop.permute.xlu0 %665
        %667 = vrot.lane.b32.xlu0 %v655, 16
        %v668 = vpop.permute.xlu0 %667
        %669 = vrot.lane.b32.xlu0 %v656, 16
        %v670 = vpop.permute.xlu0 %669
        %671 = vrot.lane.b32.xlu0 %v657, 16
        %v672 = vpop.permute.xlu0 %671
        %673 = vrot.lane.b32.xlu0 %v658, 16
        %v674 = vpop.permute.xlu0 %673
        %vm683 = vcmask 720000
        %684 = vst.msk [vmem:[#allocation2 + $0x8] sm:$0xff] %vm683, %v660
        %685 = vst.msk [vmem:[#allocation2 + $0x38] sm:$0xff] %vm683, %v662
        %686 = vst.msk [vmem:[#allocation2 + $0x68] sm:$0xff] %vm683, %v664
        %687 = vst.msk [vmem:[#allocation2 + $0x98] sm:$0xff] %vm683, %v666
        %688 = vst.msk [vmem:[#allocation2 + $0xc8] sm:$0xff] %vm683, %v668
        %689 = vst.msk [vmem:[#allocation2 + $0xf8] sm:$0xff] %vm683, %v670
        %690 = vst.msk [vmem:[#allocation2 + $0x128] sm:$0xff] %vm683, %v672
        %691 = vst.msk [vmem:[#allocation2 + $0x158] sm:$0xff] %vm683, %v674
        %s692 = scalar_lea.vmem %s168, 12
        %v693 = vld [vmem:[%s692] sm:$0xf]
        %v694 = vld [vmem:[%s692 + $0x4] sm:$0xf]
        %v695 = vld [vmem:[%s692 + $0xc] sm:$0xf]
        %v696 = vld [vmem:[%s692 + $0x10] sm:$0xf]
        %v697 = vld [vmem:[%s692 + $0x18] sm:$0xf]
        %v698 = vld [vmem:[%s692 + $0x1c] sm:$0xf]
        %v699 = vld [vmem:[%s692 + $0x24] sm:$0xf]
        %v700 = vld [vmem:[%s692 + $0x28] sm:$0xf]
        %v701 = vld [vmem:[%s692 + $0x30] sm:$0xf]
        %v702 = vld [vmem:[%s692 + $0x34] sm:$0xf]
        %v703 = vld [vmem:[%s692 + $0x3c] sm:$0xf]
        %v704 = vld [vmem:[%s692 + $0x40] sm:$0xf]
        %v705 = vld [vmem:[%s692 + $0x48] sm:$0xf]
        %v706 = vld [vmem:[%s692 + $0x4c] sm:$0xf]
        %v707 = vld [vmem:[%s692 + $0x54] sm:$0xf]
        %v708 = vld [vmem:[%s692 + $0x58] sm:$0xf]
        %v725 = vunpack.c.l.b16 %v693
        %v726 = vunpack.c.l.b16 %v694
        %v727 = vunpack.c.l.b16 %v695
        %v728 = vunpack.c.l.b16 %v696
        %v729 = vunpack.c.l.b16 %v697
        %v730 = vunpack.c.l.b16 %v698
        %v731 = vunpack.c.l.b16 %v699
        %v732 = vunpack.c.l.b16 %v700
        %v733 = vunpack.c.l.b16 %v701
        %v734 = vunpack.c.l.b16 %v702
        %v735 = vunpack.c.l.b16 %v703
        %v736 = vunpack.c.l.b16 %v704
        %v737 = vunpack.c.l.b16 %v705
        %v738 = vunpack.c.l.b16 %v706
        %v739 = vunpack.c.l.b16 %v707
        %v740 = vunpack.c.l.b16 %v708
        %v741 = vpack.c.b16 %v726, %v725
        %v742 = vpack.c.b16 %v728, %v727
        %v743 = vpack.c.b16 %v730, %v729
        %v744 = vpack.c.b16 %v732, %v731
        %v745 = vpack.c.b16 %v734, %v733
        %v746 = vpack.c.b16 %v736, %v735
        %v747 = vpack.c.b16 %v738, %v737
        %v748 = vpack.c.b16 %v740, %v739
        %749 = vrot.lane.b32.xlu0 %v741, 88
        %v750 = vpop.permute.xlu0 %749
        %751 = vrot.lane.b32.xlu0 %v742, 88
        %v752 = vpop.permute.xlu0 %751
        %753 = vrot.lane.b32.xlu0 %v743, 88
        %v754 = vpop.permute.xlu0 %753
        %755 = vrot.lane.b32.xlu0 %v744, 88
        %v756 = vpop.permute.xlu0 %755
        %757 = vrot.lane.b32.xlu0 %v745, 88
        %v758 = vpop.permute.xlu0 %757
        %759 = vrot.lane.b32.xlu0 %v746, 88
        %v760 = vpop.permute.xlu0 %759
        %761 = vrot.lane.b32.xlu0 %v747, 88
        %v762 = vpop.permute.xlu0 %761
        %763 = vrot.lane.b32.xlu0 %v748, 88
        %v764 = vpop.permute.xlu0 %763
        %vm773 = vcmask 1048256
        %774 = vst.msk [vmem:[#allocation2 + $0x8] sm:$0xff] %vm773, %v750
        %vm775 = vcmask 261120
        %776 = vst.msk [vmem:[#allocation2 + $0x10] sm:$0xff] %vm775, %v750
        %777 = vst.msk [vmem:[#allocation2 + $0x38] sm:$0xff] %vm773, %v752
        %778 = vst.msk [vmem:[#allocation2 + $0x40] sm:$0xff] %vm775, %v752
        %779 = vst.msk [vmem:[#allocation2 + $0x68] sm:$0xff] %vm773, %v754
        %780 = vst.msk [vmem:[#allocation2 + $0x70] sm:$0xff] %vm775, %v754
        %781 = vst.msk [vmem:[#allocation2 + $0x98] sm:$0xff] %vm773, %v756
        %782 = vst.msk [vmem:[#allocation2 + $0xa0] sm:$0xff] %vm775, %v756
        %783 = vst.msk [vmem:[#allocation2 + $0xc8] sm:$0xff] %vm773, %v758
        %784 = vst.msk [vmem:[#allocation2 + $0xd0] sm:$0xff] %vm775, %v758
        %785 = vst.msk [vmem:[#allocation2 + $0xf8] sm:$0xff] %vm773, %v760
        %786 = vst.msk [vmem:[#allocation2 + $0x100] sm:$0xff] %vm775, %v760
        %787 = vst.msk [vmem:[#allocation2 + $0x128] sm:$0xff] %vm773, %v762
        %788 = vst.msk [vmem:[#allocation2 + $0x130] sm:$0xff] %vm775, %v762
        %789 = vst.msk [vmem:[#allocation2 + $0x158] sm:$0xff] %vm773, %v764
        %790 = vst.msk [vmem:[#allocation2 + $0x160] sm:$0xff] %vm775, %v764
        %v791 = vld [vmem:[%s692] sm:$0xf]
        %v792 = vld [vmem:[%s692 + $0x4] sm:$0xf]
        %v793 = vld [vmem:[%s692 + $0x8] sm:$0x1]
        %v794 = vld [vmem:[%s692 + $0xc] sm:$0xf]
        %v795 = vld [vmem:[%s692 + $0x10] sm:$0xf]
        %v796 = vld [vmem:[%s692 + $0x14] sm:$0x1]
        %v797 = vld [vmem:[%s692 + $0x18] sm:$0xf]
        %v798 = vld [vmem:[%s692 + $0x1c] sm:$0xf]
        %v799 = vld [vmem:[%s692 + $0x20] sm:$0x1]
        %v800 = vld [vmem:[%s692 + $0x24] sm:$0xf]
        %v801 = vld [vmem:[%s692 + $0x28] sm:$0xf]
        %v802 = vld [vmem:[%s692 + $0x2c] sm:$0x1]
        %v803 = vld [vmem:[%s692 + $0x30] sm:$0xf]
        %v804 = vld [vmem:[%s692 + $0x34] sm:$0xf]
        %v805 = vld [vmem:[%s692 + $0x38] sm:$0x1]
        %v806 = vld [vmem:[%s692 + $0x3c] sm:$0xf]
        %v807 = vld [vmem:[%s692 + $0x40] sm:$0xf]
        %v808 = vld [vmem:[%s692 + $0x44] sm:$0x1]
        %v809 = vld [vmem:[%s692 + $0x48] sm:$0xf]
        %v810 = vld [vmem:[%s692 + $0x4c] sm:$0xf]
        %v811 = vld [vmem:[%s692 + $0x50] sm:$0x1]
        %v812 = vld [vmem:[%s692 + $0x54] sm:$0xf]
        %v813 = vld [vmem:[%s692 + $0x58] sm:$0xf]
        %v814 = vld [vmem:[%s692 + $0x5c] sm:$0x1]
        %v816 = vshrl.u32 %v791, 16
        %v818 = vrot.slane %v816, 4
        %v819 = vshll.u32 %v791, 16
        %v821 = vrot.slane %v819, 5
        %v822 = vor.u32 %v818, %v821
        %v823 = vrot.slane %v822, 4
        %v825 = vshll.u32 %v792, 16
        %v827 = vrot.slane %v825, 5
        %v828 = vsel %vm269, %v823, %v827
        %v829 = vshrl.u32 %v792, 16
        %v831 = vrot.slane %v829, 4
        %v832 = vor.u32 %v831, %v827
        %v833 = vrot.slane %v832, 4
        %v835 = vshll.u32 %v793, 16
        %v837 = vrot.slane %v835, 5
        %v838 = vsel %vm269, %v833, %v837
        %v840 = vshrl.u32 %v794, 16
        %v842 = vrot.slane %v840, 4
        %v843 = vshll.u32 %v794, 16
        %v845 = vrot.slane %v843, 5
        %v846 = vor.u32 %v842, %v845
        %v847 = vrot.slane %v846, 4
        %v849 = vshll.u32 %v795, 16
        %v851 = vrot.slane %v849, 5
        %v852 = vsel %vm269, %v847, %v851
        %v853 = vshrl.u32 %v795, 16
        %v855 = vrot.slane %v853, 4
        %v856 = vor.u32 %v855, %v851
        %v857 = vrot.slane %v856, 4
        %v859 = vshll.u32 %v796, 16
        %v861 = vrot.slane %v859, 5
        %v862 = vsel %vm269, %v857, %v861
        %v864 = vshrl.u32 %v797, 16
        %v866 = vrot.slane %v864, 4
        %v867 = vshll.u32 %v797, 16
        %v869 = vrot.slane %v867, 5
        %v870 = vor.u32 %v866, %v869
        %v871 = vrot.slane %v870, 4
        %v873 = vshll.u32 %v798, 16
        %v875 = vrot.slane %v873, 5
        %v876 = vsel %vm269, %v871, %v875
        %v877 = vshrl.u32 %v798, 16
        %v879 = vrot.slane %v877, 4
        %v880 = vor.u32 %v879, %v875
        %v881 = vrot.slane %v880, 4
        %v883 = vshll.u32 %v799, 16
        %v885 = vrot.slane %v883, 5
        %v886 = vsel %vm269, %v881, %v885
        %v888 = vshrl.u32 %v800, 16
        %v890 = vrot.slane %v888, 4
        %v891 = vshll.u32 %v800, 16
        %v893 = vrot.slane %v891, 5
        %v894 = vor.u32 %v890, %v893
        %v895 = vrot.slane %v894, 4
        %v897 = vshll.u32 %v801, 16
        %v899 = vrot.slane %v897, 5
        %v900 = vsel %vm269, %v895, %v899
        %v901 = vshrl.u32 %v801, 16
        %v903 = vrot.slane %v901, 4
        %v904 = vor.u32 %v903, %v899
        %v905 = vrot.slane %v904, 4
        %v907 = vshll.u32 %v802, 16
        %v909 = vrot.slane %v907, 5
        %v910 = vsel %vm269, %v905, %v909
        %v912 = vshrl.u32 %v803, 16
        %v914 = vrot.slane %v912, 4
        %v915 = vshll.u32 %v803, 16
        %v917 = vrot.slane %v915, 5
        %v918 = vor.u32 %v914, %v917
        %v919 = vrot.slane %v918, 4
        %v921 = vshll.u32 %v804, 16
        %v923 = vrot.slane %v921, 5
        %v924 = vsel %vm269, %v919, %v923
        %v925 = vshrl.u32 %v804, 16
        %v927 = vrot.slane %v925, 4
        %v928 = vor.u32 %v927, %v923
        %v929 = vrot.slane %v928, 4
        %v931 = vshll.u32 %v805, 16
        %v933 = vrot.slane %v931, 5
        %v934 = vsel %vm269, %v929, %v933
        %v936 = vshrl.u32 %v806, 16
        %v938 = vrot.slane %v936, 4
        %v939 = vshll.u32 %v806, 16
        %v941 = vrot.slane %v939, 5
        %v942 = vor.u32 %v938, %v941
        %v943 = vrot.slane %v942, 4
        %v945 = vshll.u32 %v807, 16
        %v947 = vrot.slane %v945, 5
        %v948 = vsel %vm269, %v943, %v947
        %v949 = vshrl.u32 %v807, 16
        %v951 = vrot.slane %v949, 4
        %v952 = vor.u32 %v951, %v947
        %v953 = vrot.slane %v952, 4
        %v955 = vshll.u32 %v808, 16
        %v957 = vrot.slane %v955, 5
        %v958 = vsel %vm269, %v953, %v957
        %v960 = vshrl.u32 %v809, 16
        %v962 = vrot.slane %v960, 4
        %v963 = vshll.u32 %v809, 16
        %v965 = vrot.slane %v963, 5
        %v966 = vor.u32 %v962, %v965
        %v967 = vrot.slane %v966, 4
        %v969 = vshll.u32 %v810, 16
        %v971 = vrot.slane %v969, 5
        %v972 = vsel %vm269, %v967, %v971
        %v973 = vshrl.u32 %v810, 16
        %v975 = vrot.slane %v973, 4
        %v976 = vor.u32 %v975, %v971
        %v977 = vrot.slane %v976, 4
        %v979 = vshll.u32 %v811, 16
        %v981 = vrot.slane %v979, 5
        %v982 = vsel %vm269, %v977, %v981
        %v984 = vshrl.u32 %v812, 16
        %v986 = vrot.slane %v984, 4
        %v987 = vshll.u32 %v812, 16
        %v989 = vrot.slane %v987, 5
        %v990 = vor.u32 %v986, %v989
        %v991 = vrot.slane %v990, 4
        %v993 = vshll.u32 %v813, 16
        %v995 = vrot.slane %v993, 5
        %v996 = vsel %vm269, %v991, %v995
        %v997 = vshrl.u32 %v813, 16
        %v999 = vrot.slane %v997, 4
        %v1000 = vor.u32 %v999, %v995
        %v1001 = vrot.slane %v1000, 4
        %v1003 = vshll.u32 %v814, 16
        %v1005 = vrot.slane %v1003, 5
        %v1006 = vsel %vm269, %v1001, %v1005
        %v1007 = vunpack.c.l.b16 %v828
        %v1008 = vunpack.c.l.b16 %v838
        %v1009 = vunpack.c.l.b16 %v852
        %v1010 = vunpack.c.l.b16 %v862
        %v1011 = vunpack.c.l.b16 %v876
        %v1012 = vunpack.c.l.b16 %v886
        %v1013 = vunpack.c.l.b16 %v900
        %v1014 = vunpack.c.l.b16 %v910
        %v1015 = vunpack.c.l.b16 %v924
        %v1016 = vunpack.c.l.b16 %v934
        %v1017 = vunpack.c.l.b16 %v948
        %v1018 = vunpack.c.l.b16 %v958
        %v1019 = vunpack.c.l.b16 %v972
        %v1020 = vunpack.c.l.b16 %v982
        %v1021 = vunpack.c.l.b16 %v996
        %v1022 = vunpack.c.l.b16 %v1006
        %v1023 = vpack.c.b16 %v1008, %v1007
        %v1024 = vpack.c.b16 %v1010, %v1009
        %v1025 = vpack.c.b16 %v1012, %v1011
        %v1026 = vpack.c.b16 %v1014, %v1013
        %v1027 = vpack.c.b16 %v1016, %v1015
        %v1028 = vpack.c.b16 %v1018, %v1017
        %v1029 = vpack.c.b16 %v1020, %v1019
        %v1030 = vpack.c.b16 %v1022, %v1021
        %1031 = vrot.lane.b32.xlu0 %v1023, 32
        %v1032 = vpop.permute.xlu0 %1031
        %1033 = vrot.lane.b32.xlu0 %v1024, 32
        %v1034 = vpop.permute.xlu0 %1033
        %1035 = vrot.lane.b32.xlu0 %v1025, 32
        %v1036 = vpop.permute.xlu0 %1035
        %1037 = vrot.lane.b32.xlu0 %v1026, 32
        %v1038 = vpop.permute.xlu0 %1037
        %1039 = vrot.lane.b32.xlu0 %v1027, 32
        %v1040 = vpop.permute.xlu0 %1039
        %1041 = vrot.lane.b32.xlu0 %v1028, 32
        %v1042 = vpop.permute.xlu0 %1041
        %1043 = vrot.lane.b32.xlu0 %v1029, 32
        %v1044 = vpop.permute.xlu0 %1043
        %1045 = vrot.lane.b32.xlu0 %v1030, 32
        %v1046 = vpop.permute.xlu0 %1045
        %vm1055 = vcmask 851200
        %1056 = vst.msk [vmem:[#allocation2 + $0x10] sm:$0xff] %vm1055, %v1032
        %1057 = vst.msk [vmem:[#allocation2 + $0x40] sm:$0xff] %vm1055, %v1034
        %1058 = vst.msk [vmem:[#allocation2 + $0x70] sm:$0xff] %vm1055, %v1036
        %1059 = vst.msk [vmem:[#allocation2 + $0xa0] sm:$0xff] %vm1055, %v1038
        %1060 = vst.msk [vmem:[#allocation2 + $0xd0] sm:$0xff] %vm1055, %v1040
        %1061 = vst.msk [vmem:[#allocation2 + $0x100] sm:$0xff] %vm1055, %v1042
        %1062 = vst.msk [vmem:[#allocation2 + $0x130] sm:$0xff] %vm1055, %v1044
        %1063 = vst.msk [vmem:[#allocation2 + $0x160] sm:$0xff] %vm1055, %v1046
        %v1064 = vld [vmem:[%s692] sm:$0xe]
        %v1065 = vld [vmem:[%s692 + $0x4] sm:$0xf]
        %v1066 = vld [vmem:[%s692 + $0x8] sm:$0x1]
        %v1067 = vld [vmem:[%s692 + $0xc] sm:$0xe]
        %v1068 = vld [vmem:[%s692 + $0x10] sm:$0xf]
        %v1069 = vld [vmem:[%s692 + $0x14] sm:$0x1]
        %v1070 = vld [vmem:[%s692 + $0x18] sm:$0xe]
        %v1071 = vld [vmem:[%s692 + $0x1c] sm:$0xf]
        %v1072 = vld [vmem:[%s692 + $0x20] sm:$0x1]
        %v1073 = vld [vmem:[%s692 + $0x24] sm:$0xe]
        %v1074 = vld [vmem:[%s692 + $0x28] sm:$0xf]
        %v1075 = vld [vmem:[%s692 + $0x2c] sm:$0x1]
        %v1076 = vld [vmem:[%s692 + $0x30] sm:$0xe]
        %v1077 = vld [vmem:[%s692 + $0x34] sm:$0xf]
        %v1078 = vld [vmem:[%s692 + $0x38] sm:$0x1]
        %v1079 = vld [vmem:[%s692 + $0x3c] sm:$0xe]
        %v1080 = vld [vmem:[%s692 + $0x40] sm:$0xf]
        %v1081 = vld [vmem:[%s692 + $0x44] sm:$0x1]
        %v1082 = vld [vmem:[%s692 + $0x48] sm:$0xe]
        %v1083 = vld [vmem:[%s692 + $0x4c] sm:$0xf]
        %v1084 = vld [vmem:[%s692 + $0x50] sm:$0x1]
        %v1085 = vld [vmem:[%s692 + $0x54] sm:$0xe]
        %v1086 = vld [vmem:[%s692 + $0x58] sm:$0xf]
        %v1087 = vld [vmem:[%s692 + $0x5c] sm:$0x1]
        %v1112 = vrot.slane %v1064, 5
        %v1113 = vrot.slane %v1112, 4
        %v1114 = vrot.slane %v1065, 5
        %v1115 = vsel %vm578, %v1113, %v1114
        %v1116 = vrot.slane %v1114, 4
        %v1117 = vrot.slane %v1066, 5
        %v1118 = vsel %vm578, %v1116, %v1117
        %v1119 = vrot.slane %v1067, 5
        %v1120 = vrot.slane %v1119, 4
        %v1121 = vrot.slane %v1068, 5
        %v1122 = vsel %vm578, %v1120, %v1121
        %v1123 = vrot.slane %v1121, 4
        %v1124 = vrot.slane %v1069, 5
        %v1125 = vsel %vm578, %v1123, %v1124
        %v1126 = vrot.slane %v1070, 5
        %v1127 = vrot.slane %v1126, 4
        %v1128 = vrot.slane %v1071, 5
        %v1129 = vsel %vm578, %v1127, %v1128
        %v1130 = vrot.slane %v1128, 4
        %v1131 = vrot.slane %v1072, 5
        %v1132 = vsel %vm578, %v1130, %v1131
        %v1133 = vrot.slane %v1073, 5
        %v1134 = vrot.slane %v1133, 4
        %v1135 = vrot.slane %v1074, 5
        %v1136 = vsel %vm578, %v1134, %v1135
        %v1137 = vrot.slane %v1135, 4
        %v1138 = vrot.slane %v1075, 5
        %v1139 = vsel %vm578, %v1137, %v1138
        %v1140 = vrot.slane %v1076, 5
        %v1141 = vrot.slane %v1140, 4
        %v1142 = vrot.slane %v1077, 5
        %v1143 = vsel %vm578, %v1141, %v1142
        %v1144 = vrot.slane %v1142, 4
        %v1145 = vrot.slane %v1078, 5
        %v1146 = vsel %vm578, %v1144, %v1145
        %v1147 = vrot.slane %v1079, 5
        %v1148 = vrot.slane %v1147, 4
        %v1149 = vrot.slane %v1080, 5
        %v1150 = vsel %vm578, %v1148, %v1149
        %v1151 = vrot.slane %v1149, 4
        %v1152 = vrot.slane %v1081, 5
        %v1153 = vsel %vm578, %v1151, %v1152
        %v1154 = vrot.slane %v1082, 5
        %v1155 = vrot.slane %v1154, 4
        %v1156 = vrot.slane %v1083, 5
        %v1157 = vsel %vm578, %v1155, %v1156
        %v1158 = vrot.slane %v1156, 4
        %v1159 = vrot.slane %v1084, 5
        %v1160 = vsel %vm578, %v1158, %v1159
        %v1161 = vrot.slane %v1085, 5
        %v1162 = vrot.slane %v1161, 4
        %v1163 = vrot.slane %v1086, 5
        %v1164 = vsel %vm578, %v1162, %v1163
        %v1165 = vrot.slane %v1163, 4
        %v1166 = vrot.slane %v1087, 5
        %v1167 = vsel %vm578, %v1165, %v1166
        %v1168 = vunpack.c.l.b16 %v1115
        %v1169 = vunpack.c.l.b16 %v1118
        %v1170 = vunpack.c.l.b16 %v1122
        %v1171 = vunpack.c.l.b16 %v1125
        %v1172 = vunpack.c.l.b16 %v1129
        %v1173 = vunpack.c.l.b16 %v1132
        %v1174 = vunpack.c.l.b16 %v1136
        %v1175 = vunpack.c.l.b16 %v1139
        %v1176 = vunpack.c.l.b16 %v1143
        %v1177 = vunpack.c.l.b16 %v1146
        %v1178 = vunpack.c.l.b16 %v1150
        %v1179 = vunpack.c.l.b16 %v1153
        %v1180 = vunpack.c.l.b16 %v1157
        %v1181 = vunpack.c.l.b16 %v1160
        %v1182 = vunpack.c.l.b16 %v1164
        %v1183 = vunpack.c.l.b16 %v1167
        %v1184 = vpack.c.b16 %v1169, %v1168
        %v1185 = vpack.c.b16 %v1171, %v1170
        %v1186 = vpack.c.b16 %v1173, %v1172
        %v1187 = vpack.c.b16 %v1175, %v1174
        %v1188 = vpack.c.b16 %v1177, %v1176
        %v1189 = vpack.c.b16 %v1179, %v1178
        %v1190 = vpack.c.b16 %v1181, %v1180
        %v1191 = vpack.c.b16 %v1183, %v1182
        %1192 = vrot.lane.b32.xlu0 %v1184, 104
        %v1193 = vpop.permute.xlu0 %1192
        %1194 = vrot.lane.b32.xlu0 %v1185, 104
        %v1195 = vpop.permute.xlu0 %1194
        %1196 = vrot.lane.b32.xlu0 %v1186, 104
        %v1197 = vpop.permute.xlu0 %1196
        %1198 = vrot.lane.b32.xlu0 %v1187, 104
        %v1199 = vpop.permute.xlu0 %1198
        %1200 = vrot.lane.b32.xlu0 %v1188, 104
        %v1201 = vpop.permute.xlu0 %1200
        %1202 = vrot.lane.b32.xlu0 %v1189, 104
        %v1203 = vpop.permute.xlu0 %1202
        %1204 = vrot.lane.b32.xlu0 %v1190, 104
        %v1205 = vpop.permute.xlu0 %1204
        %1206 = vrot.lane.b32.xlu0 %v1191, 104
        %v1207 = vpop.permute.xlu0 %1206
        %vm1216 = vcmask 1048384
        %1217 = vst.msk [vmem:[#allocation2 + $0x10] sm:$0xff] %vm1216, %v1193
        %vm1218 = vcmask 392192
        %1219 = vst.msk [vmem:[#allocation2 + $0x18] sm:$0xff] %vm1218, %v1193
        %1220 = vst.msk [vmem:[#allocation2 + $0x40] sm:$0xff] %vm1216, %v1195
        %1221 = vst.msk [vmem:[#allocation2 + $0x48] sm:$0xff] %vm1218, %v1195
        %1222 = vst.msk [vmem:[#allocation2 + $0x70] sm:$0xff] %vm1216, %v1197
        %1223 = vst.msk [vmem:[#allocation2 + $0x78] sm:$0xff] %vm1218, %v1197
        %1224 = vst.msk [vmem:[#allocation2 + $0xa0] sm:$0xff] %vm1216, %v1199
        %1225 = vst.msk [vmem:[#allocation2 + $0xa8] sm:$0xff] %vm1218, %v1199
        %1226 = vst.msk [vmem:[#allocation2 + $0xd0] sm:$0xff] %vm1216, %v1201
        %1227 = vst.msk [vmem:[#allocation2 + $0xd8] sm:$0xff] %vm1218, %v1201
        %1228 = vst.msk [vmem:[#allocation2 + $0x100] sm:$0xff] %vm1216, %v1203
        %1229 = vst.msk [vmem:[#allocation2 + $0x108] sm:$0xff] %vm1218, %v1203
        %1230 = vst.msk [vmem:[#allocation2 + $0x130] sm:$0xff] %vm1216, %v1205
        %1231 = vst.msk [vmem:[#allocation2 + $0x138] sm:$0xff] %vm1218, %v1205
        %1232 = vst.msk [vmem:[#allocation2 + $0x160] sm:$0xff] %vm1216, %v1207
        %1233 = vst.msk [vmem:[#allocation2 + $0x168] sm:$0xff] %vm1218, %v1207
        %s1234 = scalar_lea.vmem %s168, 24
        %v1235 = vld [vmem:[%s1234] sm:$0xf]
        %v1236 = vld [vmem:[%s1234 + $0x4] sm:$0xf]
        %v1237 = vld [vmem:[%s1234 + $0xc] sm:$0xf]
        %v1238 = vld [vmem:[%s1234 + $0x10] sm:$0xf]
        %v1239 = vld [vmem:[%s1234 + $0x18] sm:$0xf]
        %v1240 = vld [vmem:[%s1234 + $0x1c] sm:$0xf]
        %v1241 = vld [vmem:[%s1234 + $0x24] sm:$0xf]
        %v1242 = vld [vmem:[%s1234 + $0x28] sm:$0xf]
        %v1243 = vld [vmem:[%s1234 + $0x30] sm:$0xf]
        %v1244 = vld [vmem:[%s1234 + $0x34] sm:$0xf]
        %v1245 = vld [vmem:[%s1234 + $0x3c] sm:$0xf]
        %v1246 = vld [vmem:[%s1234 + $0x40] sm:$0xf]
        %v1247 = vld [vmem:[%s1234 + $0x48] sm:$0xf]
        %v1248 = vld [vmem:[%s1234 + $0x4c] sm:$0xf]
        %v1249 = vld [vmem:[%s1234 + $0x54] sm:$0xf]
        %v1250 = vld [vmem:[%s1234 + $0x58] sm:$0xf]
        %v1267 = vunpack.c.l.b16 %v1235
        %v1268 = vunpack.c.l.b16 %v1236
        %v1269 = vunpack.c.l.b16 %v1237
        %v1270 = vunpack.c.l.b16 %v1238
        %v1271 = vunpack.c.l.b16 %v1239
        %v1272 = vunpack.c.l.b16 %v1240
        %v1273 = vunpack.c.l.b16 %v1241
        %v1274 = vunpack.c.l.b16 %v1242
        %v1275 = vunpack.c.l.b16 %v1243
        %v1276 = vunpack.c.l.b16 %v1244
        %v1277 = vunpack.c.l.b16 %v1245
        %v1278 = vunpack.c.l.b16 %v1246
        %v1279 = vunpack.c.l.b16 %v1247
        %v1280 = vunpack.c.l.b16 %v1248
        %v1281 = vunpack.c.l.b16 %v1249
        %v1282 = vunpack.c.l.b16 %v1250
        %v1283 = vpack.c.b16 %v1268, %v1267
        %v1284 = vpack.c.b16 %v1270, %v1269
        %v1285 = vpack.c.b16 %v1272, %v1271
        %v1286 = vpack.c.b16 %v1274, %v1273
        %v1287 = vpack.c.b16 %v1276, %v1275
        %v1288 = vpack.c.b16 %v1278, %v1277
        %v1289 = vpack.c.b16 %v1280, %v1279
        %v1290 = vpack.c.b16 %v1282, %v1281
        %1291 = vrot.lane.b32.xlu0 %v1283, 48
        %v1292 = vpop.permute.xlu0 %1291
        %1293 = vrot.lane.b32.xlu0 %v1284, 48
        %v1294 = vpop.permute.xlu0 %1293
        %1295 = vrot.lane.b32.xlu0 %v1285, 48
        %v1296 = vpop.permute.xlu0 %1295
        %1297 = vrot.lane.b32.xlu0 %v1286, 48
        %v1298 = vpop.permute.xlu0 %1297
        %1299 = vrot.lane.b32.xlu0 %v1287, 48
        %v1300 = vpop.permute.xlu0 %1299
        %1301 = vrot.lane.b32.xlu0 %v1288, 48
        %v1302 = vpop.permute.xlu0 %1301
        %1303 = vrot.lane.b32.xlu0 %v1289, 48
        %v1304 = vpop.permute.xlu0 %1303
        %1305 = vrot.lane.b32.xlu0 %v1290, 48
        %v1306 = vpop.permute.xlu0 %1305
        %vm1315 = vcmask 982400
        %1316 = vst.msk [vmem:[#allocation2 + $0x18] sm:$0xff] %vm1315, %v1292
        %1317 = vst.msk [vmem:[#allocation2 + $0x48] sm:$0xff] %vm1315, %v1294
        %1318 = vst.msk [vmem:[#allocation2 + $0x78] sm:$0xff] %vm1315, %v1296
        %1319 = vst.msk [vmem:[#allocation2 + $0xa8] sm:$0xff] %vm1315, %v1298
        %1320 = vst.msk [vmem:[#allocation2 + $0xd8] sm:$0xff] %vm1315, %v1300
        %1321 = vst.msk [vmem:[#allocation2 + $0x108] sm:$0xff] %vm1315, %v1302
        %1322 = vst.msk [vmem:[#allocation2 + $0x138] sm:$0xff] %vm1315, %v1304
        %1323 = vst.msk [vmem:[#allocation2 + $0x168] sm:$0xff] %vm1315, %v1306
        %v1324 = vld [vmem:[%s1234] sm:$0xf]
        %v1325 = vld [vmem:[%s1234 + $0x4] sm:$0xf]
        %v1326 = vld [vmem:[%s1234 + $0x8] sm:$0x1]
        %v1327 = vld [vmem:[%s1234 + $0xc] sm:$0xf]
        %v1328 = vld [vmem:[%s1234 + $0x10] sm:$0xf]
        %v1329 = vld [vmem:[%s1234 + $0x14] sm:$0x1]
        %v1330 = vld [vmem:[%s1234 + $0x18] sm:$0xf]
        %v1331 = vld [vmem:[%s1234 + $0x1c] sm:$0xf]
        %v1332 = vld [vmem:[%s1234 + $0x20] sm:$0x1]
        %v1333 = vld [vmem:[%s1234 + $0x24] sm:$0xf]
        %v1334 = vld [vmem:[%s1234 + $0x28] sm:$0xf]
        %v1335 = vld [vmem:[%s1234 + $0x2c] sm:$0x1]
        %v1336 = vld [vmem:[%s1234 + $0x30] sm:$0xf]
        %v1337 = vld [vmem:[%s1234 + $0x34] sm:$0xf]
        %v1338 = vld [vmem:[%s1234 + $0x38] sm:$0x1]
        %v1339 = vld [vmem:[%s1234 + $0x3c] sm:$0xf]
        %v1340 = vld [vmem:[%s1234 + $0x40] sm:$0xf]
        %v1341 = vld [vmem:[%s1234 + $0x44] sm:$0x1]
        %v1342 = vld [vmem:[%s1234 + $0x48] sm:$0xf]
        %v1343 = vld [vmem:[%s1234 + $0x4c] sm:$0xf]
        %v1344 = vld [vmem:[%s1234 + $0x50] sm:$0x1]
        %v1345 = vld [vmem:[%s1234 + $0x54] sm:$0xf]
        %v1346 = vld [vmem:[%s1234 + $0x58] sm:$0xf]
        %v1347 = vld [vmem:[%s1234 + $0x5c] sm:$0x1]
        %v1349 = vshrl.u32 %v1324, 16
        %v1351 = vrot.slane %v1349, 4
        %v1352 = vshll.u32 %v1324, 16
        %v1354 = vrot.slane %v1352, 5
        %v1355 = vor.u32 %v1351, %v1354
        %v1356 = vrot.slane %v1355, 4
        %v1358 = vshll.u32 %v1325, 16
        %v1360 = vrot.slane %v1358, 5
        %v1361 = vsel %vm269, %v1356, %v1360
        %v1362 = vshrl.u32 %v1325, 16
        %v1364 = vrot.slane %v1362, 4
        %v1365 = vor.u32 %v1364, %v1360
        %v1366 = vrot.slane %v1365, 4
        %v1368 = vshll.u32 %v1326, 16
        %v1370 = vrot.slane %v1368, 5
        %v1371 = vsel %vm269, %v1366, %v1370
        %v1373 = vshrl.u32 %v1327, 16
        %v1375 = vrot.slane %v1373, 4
        %v1376 = vshll.u32 %v1327, 16
        %v1378 = vrot.slane %v1376, 5
        %v1379 = vor.u32 %v1375, %v1378
        %v1380 = vrot.slane %v1379, 4
        %v1382 = vshll.u32 %v1328, 16
        %v1384 = vrot.slane %v1382, 5
        %v1385 = vsel %vm269, %v1380, %v1384
        %v1386 = vshrl.u32 %v1328, 16
        %v1388 = vrot.slane %v1386, 4
        %v1389 = vor.u32 %v1388, %v1384
        %v1390 = vrot.slane %v1389, 4
        %v1392 = vshll.u32 %v1329, 16
        %v1394 = vrot.slane %v1392, 5
        %v1395 = vsel %vm269, %v1390, %v1394
        %v1397 = vshrl.u32 %v1330, 16
        %v1399 = vrot.slane %v1397, 4
        %v1400 = vshll.u32 %v1330, 16
        %v1402 = vrot.slane %v1400, 5
        %v1403 = vor.u32 %v1399, %v1402
        %v1404 = vrot.slane %v1403, 4
        %v1406 = vshll.u32 %v1331, 16
        %v1408 = vrot.slane %v1406, 5
        %v1409 = vsel %vm269, %v1404, %v1408
        %v1410 = vshrl.u32 %v1331, 16
        %v1412 = vrot.slane %v1410, 4
        %v1413 = vor.u32 %v1412, %v1408
        %v1414 = vrot.slane %v1413, 4
        %v1416 = vshll.u32 %v1332, 16
        %v1418 = vrot.slane %v1416, 5
        %v1419 = vsel %vm269, %v1414, %v1418
        %v1421 = vshrl.u32 %v1333, 16
        %v1423 = vrot.slane %v1421, 4
        %v1424 = vshll.u32 %v1333, 16
        %v1426 = vrot.slane %v1424, 5
        %v1427 = vor.u32 %v1423, %v1426
        %v1428 = vrot.slane %v1427, 4
        %v1430 = vshll.u32 %v1334, 16
        %v1432 = vrot.slane %v1430, 5
        %v1433 = vsel %vm269, %v1428, %v1432
        %v1434 = vshrl.u32 %v1334, 16
        %v1436 = vrot.slane %v1434, 4
        %v1437 = vor.u32 %v1436, %v1432
        %v1438 = vrot.slane %v1437, 4
        %v1440 = vshll.u32 %v1335, 16
        %v1442 = vrot.slane %v1440, 5
        %v1443 = vsel %vm269, %v1438, %v1442
        %v1445 = vshrl.u32 %v1336, 16
        %v1447 = vrot.slane %v1445, 4
        %v1448 = vshll.u32 %v1336, 16
        %v1450 = vrot.slane %v1448, 5
        %v1451 = vor.u32 %v1447, %v1450
        %v1452 = vrot.slane %v1451, 4
        %v1454 = vshll.u32 %v1337, 16
        %v1456 = vrot.slane %v1454, 5
        %v1457 = vsel %vm269, %v1452, %v1456
        %v1458 = vshrl.u32 %v1337, 16
        %v1460 = vrot.slane %v1458, 4
        %v1461 = vor.u32 %v1460, %v1456
        %v1462 = vrot.slane %v1461, 4
        %v1464 = vshll.u32 %v1338, 16
        %v1466 = vrot.slane %v1464, 5
        %v1467 = vsel %vm269, %v1462, %v1466
        %v1469 = vshrl.u32 %v1339, 16
        %v1471 = vrot.slane %v1469, 4
        %v1472 = vshll.u32 %v1339, 16
        %v1474 = vrot.slane %v1472, 5
        %v1475 = vor.u32 %v1471, %v1474
        %v1476 = vrot.slane %v1475, 4
        %v1478 = vshll.u32 %v1340, 16
        %v1480 = vrot.slane %v1478, 5
        %v1481 = vsel %vm269, %v1476, %v1480
        %v1482 = vshrl.u32 %v1340, 16
        %v1484 = vrot.slane %v1482, 4
        %v1485 = vor.u32 %v1484, %v1480
        %v1486 = vrot.slane %v1485, 4
        %v1488 = vshll.u32 %v1341, 16
        %v1490 = vrot.slane %v1488, 5
        %v1491 = vsel %vm269, %v1486, %v1490
        %v1493 = vshrl.u32 %v1342, 16
        %v1495 = vrot.slane %v1493, 4
        %v1496 = vshll.u32 %v1342, 16
        %v1498 = vrot.slane %v1496, 5
        %v1499 = vor.u32 %v1495, %v1498
        %v1500 = vrot.slane %v1499, 4
        %v1502 = vshll.u32 %v1343, 16
        %v1504 = vrot.slane %v1502, 5
        %v1505 = vsel %vm269, %v1500, %v1504
        %v1506 = vshrl.u32 %v1343, 16
        %v1508 = vrot.slane %v1506, 4
        %v1509 = vor.u32 %v1508, %v1504
        %v1510 = vrot.slane %v1509, 4
        %v1512 = vshll.u32 %v1344, 16
        %v1514 = vrot.slane %v1512, 5
        %v1515 = vsel %vm269, %v1510, %v1514
        %v1517 = vshrl.u32 %v1345, 16
        %v1519 = vrot.slane %v1517, 4
        %v1520 = vshll.u32 %v1345, 16
        %v1522 = vrot.slane %v1520, 5
        %v1523 = vor.u32 %v1519, %v1522
        %v1524 = vrot.slane %v1523, 4
        %v1526 = vshll.u32 %v1346, 16
        %v1528 = vrot.slane %v1526, 5
        %v1529 = vsel %vm269, %v1524, %v1528
        %v1530 = vshrl.u32 %v1346, 16
        %v1532 = vrot.slane %v1530, 4
        %v1533 = vor.u32 %v1532, %v1528
        %v1534 = vrot.slane %v1533, 4
        %v1536 = vshll.u32 %v1347, 16
        %v1538 = vrot.slane %v1536, 5
        %v1539 = vsel %vm269, %v1534, %v1538
        %v1540 = vunpack.c.l.b16 %v1361
        %v1541 = vunpack.c.l.b16 %v1371
        %v1542 = vunpack.c.l.b16 %v1385
        %v1543 = vunpack.c.l.b16 %v1395
        %v1544 = vunpack.c.l.b16 %v1409
        %v1545 = vunpack.c.l.b16 %v1419
        %v1546 = vunpack.c.l.b16 %v1433
        %v1547 = vunpack.c.l.b16 %v1443
        %v1548 = vunpack.c.l.b16 %v1457
        %v1549 = vunpack.c.l.b16 %v1467
        %v1550 = vunpack.c.l.b16 %v1481
        %v1551 = vunpack.c.l.b16 %v1491
        %v1552 = vunpack.c.l.b16 %v1505
        %v1553 = vunpack.c.l.b16 %v1515
        %v1554 = vunpack.c.l.b16 %v1529
        %v1555 = vunpack.c.l.b16 %v1539
        %v1556 = vpack.c.b16 %v1541, %v1540
        %v1557 = vpack.c.b16 %v1543, %v1542
        %v1558 = vpack.c.b16 %v1545, %v1544
        %v1559 = vpack.c.b16 %v1547, %v1546
        %v1560 = vpack.c.b16 %v1549, %v1548
        %v1561 = vpack.c.b16 %v1551, %v1550
        %v1562 = vpack.c.b16 %v1553, %v1552
        %v1563 = vpack.c.b16 %v1555, %v1554
        %1564 = vrot.lane.b32.xlu0 %v1556, 120
        %v1565 = vpop.permute.xlu0 %1564
        %1566 = vrot.lane.b32.xlu0 %v1557, 120
        %v1567 = vpop.permute.xlu0 %1566
        %1568 = vrot.lane.b32.xlu0 %v1558, 120
        %v1569 = vpop.permute.xlu0 %1568
        %1570 = vrot.lane.b32.xlu0 %v1559, 120
        %v1571 = vpop.permute.xlu0 %1570
        %1572 = vrot.lane.b32.xlu0 %v1560, 120
        %v1573 = vpop.permute.xlu0 %1572
        %1574 = vrot.lane.b32.xlu0 %v1561, 120
        %v1575 = vpop.permute.xlu0 %1574
        %1576 = vrot.lane.b32.xlu0 %v1562, 120
        %v1577 = vpop.permute.xlu0 %1576
        %1578 = vrot.lane.b32.xlu0 %v1563, 120
        %v1579 = vpop.permute.xlu0 %1578
        %vm1588 = vcmask 1048512
        %1589 = vst.msk [vmem:[#allocation2 + $0x18] sm:$0xff] %vm1588, %v1565
        %vm1590 = vcmask 523264
        %1591 = vst.msk [vmem:[#allocation2 + $0x20] sm:$0xff] %vm1590, %v1565
        %1592 = vst.msk [vmem:[#allocation2 + $0x48] sm:$0xff] %vm1588, %v1567
        %1593 = vst.msk [vmem:[#allocation2 + $0x50] sm:$0xff] %vm1590, %v1567
        %1594 = vst.msk [vmem:[#allocation2 + $0x78] sm:$0xff] %vm1588, %v1569
        %1595 = vst.msk [vmem:[#allocation2 + $0x80] sm:$0xff] %vm1590, %v1569
        %1596 = vst.msk [vmem:[#allocation2 + $0xa8] sm:$0xff] %vm1588, %v1571
        %1597 = vst.msk [vmem:[#allocation2 + $0xb0] sm:$0xff] %vm1590, %v1571
        %1598 = vst.msk [vmem:[#allocation2 + $0xd8] sm:$0xff] %vm1588, %v1573
        %1599 = vst.msk [vmem:[#allocation2 + $0xe0] sm:$0xff] %vm1590, %v1573
        %1600 = vst.msk [vmem:[#allocation2 + $0x108] sm:$0xff] %vm1588, %v1575
        %1601 = vst.msk [vmem:[#allocation2 + $0x110] sm:$0xff] %vm1590, %v1575
        %1602 = vst.msk [vmem:[#allocation2 + $0x138] sm:$0xff] %vm1588, %v1577
        %1603 = vst.msk [vmem:[#allocation2 + $0x140] sm:$0xff] %vm1590, %v1577
        %1604 = vst.msk [vmem:[#allocation2 + $0x168] sm:$0xff] %vm1588, %v1579
        %1605 = vst.msk [vmem:[#allocation2 + $0x170] sm:$0xff] %vm1590, %v1579
        %v1606 = vld [vmem:[%s1234] sm:$0xe]
        %v1607 = vld [vmem:[%s1234 + $0x4] sm:$0xf]
        %v1608 = vld [vmem:[%s1234 + $0x8] sm:$0x1]
        %v1609 = vld [vmem:[%s1234 + $0xc] sm:$0xe]
        %v1610 = vld [vmem:[%s1234 + $0x10] sm:$0xf]
        %v1611 = vld [vmem:[%s1234 + $0x14] sm:$0x1]
        %v1612 = vld [vmem:[%s1234 + $0x18] sm:$0xe]
        %v1613 = vld [vmem:[%s1234 + $0x1c] sm:$0xf]
        %v1614 = vld [vmem:[%s1234 + $0x20] sm:$0x1]
        %v1615 = vld [vmem:[%s1234 + $0x24] sm:$0xe]
        %v1616 = vld [vmem:[%s1234 + $0x28] sm:$0xf]
        %v1617 = vld [vmem:[%s1234 + $0x2c] sm:$0x1]
        %v1618 = vld [vmem:[%s1234 + $0x30] sm:$0xe]
        %v1619 = vld [vmem:[%s1234 + $0x34] sm:$0xf]
        %v1620 = vld [vmem:[%s1234 + $0x38] sm:$0x1]
        %v1621 = vld [vmem:[%s1234 + $0x3c] sm:$0xe]
        %v1622 = vld [vmem:[%s1234 + $0x40] sm:$0xf]
        %v1623 = vld [vmem:[%s1234 + $0x44] sm:$0x1]
        %v1624 = vld [vmem:[%s1234 + $0x48] sm:$0xe]
        %v1625 = vld [vmem:[%s1234 + $0x4c] sm:$0xf]
        %v1626 = vld [vmem:[%s1234 + $0x50] sm:$0x1]
        %v1627 = vld [vmem:[%s1234 + $0x54] sm:$0xe]
        %v1628 = vld [vmem:[%s1234 + $0x58] sm:$0xf]
        %v1629 = vld [vmem:[%s1234 + $0x5c] sm:$0x1]
        %v1654 = vrot.slane %v1606, 5
        %v1655 = vrot.slane %v1654, 4
        %v1656 = vrot.slane %v1607, 5
        %v1657 = vsel %vm578, %v1655, %v1656
        %v1658 = vrot.slane %v1656, 4
        %v1659 = vrot.slane %v1608, 5
        %v1660 = vsel %vm578, %v1658, %v1659
        %v1661 = vrot.slane %v1609, 5
        %v1662 = vrot.slane %v1661, 4
        %v1663 = vrot.slane %v1610, 5
        %v1664 = vsel %vm578, %v1662, %v1663
        %v1665 = vrot.slane %v1663, 4
        %v1666 = vrot.slane %v1611, 5
        %v1667 = vsel %vm578, %v1665, %v1666
        %v1668 = vrot.slane %v1612, 5
        %v1669 = vrot.slane %v1668, 4
        %v1670 = vrot.slane %v1613, 5
        %v1671 = vsel %vm578, %v1669, %v1670
        %v1672 = vrot.slane %v1670, 4
        %v1673 = vrot.slane %v1614, 5
        %v1674 = vsel %vm578, %v1672, %v1673
        %v1675 = vrot.slane %v1615, 5
        %v1676 = vrot.slane %v1675, 4
        %v1677 = vrot.slane %v1616, 5
        %v1678 = vsel %vm578, %v1676, %v1677
        %v1679 = vrot.slane %v1677, 4
        %v1680 = vrot.slane %v1617, 5
        %v1681 = vsel %vm578, %v1679, %v1680
        %v1682 = vrot.slane %v1618, 5
        %v1683 = vrot.slane %v1682, 4
        %v1684 = vrot.slane %v1619, 5
        %v1685 = vsel %vm578, %v1683, %v1684
        %v1686 = vrot.slane %v1684, 4
        %v1687 = vrot.slane %v1620, 5
        %v1688 = vsel %vm578, %v1686, %v1687
        %v1689 = vrot.slane %v1621, 5
        %v1690 = vrot.slane %v1689, 4
        %v1691 = vrot.slane %v1622, 5
        %v1692 = vsel %vm578, %v1690, %v1691
        %v1693 = vrot.slane %v1691, 4
        %v1694 = vrot.slane %v1623, 5
        %v1695 = vsel %vm578, %v1693, %v1694
        %v1696 = vrot.slane %v1624, 5
        %v1697 = vrot.slane %v1696, 4
        %v1698 = vrot.slane %v1625, 5
        %v1699 = vsel %vm578, %v1697, %v1698
        %v1700 = vrot.slane %v1698, 4
        %v1701 = vrot.slane %v1626, 5
        %v1702 = vsel %vm578, %v1700, %v1701
        %v1703 = vrot.slane %v1627, 5
        %v1704 = vrot.slane %v1703, 4
        %v1705 = vrot.slane %v1628, 5
        %v1706 = vsel %vm578, %v1704, %v1705
        %v1707 = vrot.slane %v1705, 4
        %v1708 = vrot.slane %v1629, 5
        %v1709 = vsel %vm578, %v1707, %v1708
        %v1710 = vunpack.c.l.b16 %v1657
        %v1711 = vunpack.c.l.b16 %v1660
        %v1712 = vunpack.c.l.b16 %v1664
        %v1713 = vunpack.c.l.b16 %v1667
        %v1714 = vunpack.c.l.b16 %v1671
        %v1715 = vunpack.c.l.b16 %v1674
        %v1716 = vunpack.c.l.b16 %v1678
        %v1717 = vunpack.c.l.b16 %v1681
        %v1718 = vunpack.c.l.b16 %v1685
        %v1719 = vunpack.c.l.b16 %v1688
        %v1720 = vunpack.c.l.b16 %v1692
        %v1721 = vunpack.c.l.b16 %v1695
        %v1722 = vunpack.c.l.b16 %v1699
        %v1723 = vunpack.c.l.b16 %v1702
        %v1724 = vunpack.c.l.b16 %v1706
        %v1725 = vunpack.c.l.b16 %v1709
        %v1726 = vpack.c.b16 %v1711, %v1710
        %v1727 = vpack.c.b16 %v1713, %v1712
        %v1728 = vpack.c.b16 %v1715, %v1714
        %v1729 = vpack.c.b16 %v1717, %v1716
        %v1730 = vpack.c.b16 %v1719, %v1718
        %v1731 = vpack.c.b16 %v1721, %v1720
        %v1732 = vpack.c.b16 %v1723, %v1722
        %v1733 = vpack.c.b16 %v1725, %v1724
        %1734 = vrot.lane.b32.xlu0 %v1726, 64
        %v1735 = vpop.permute.xlu0 %1734
        %1736 = vrot.lane.b32.xlu0 %v1727, 64
        %v1737 = vpop.permute.xlu0 %1736
        %1738 = vrot.lane.b32.xlu0 %v1728, 64
        %v1739 = vpop.permute.xlu0 %1738
        %1740 = vrot.lane.b32.xlu0 %v1729, 64
        %v1741 = vpop.permute.xlu0 %1740
        %1742 = vrot.lane.b32.xlu0 %v1730, 64
        %v1743 = vpop.permute.xlu0 %1742
        %1744 = vrot.lane.b32.xlu0 %v1731, 64
        %v1745 = vpop.permute.xlu0 %1744
        %1746 = vrot.lane.b32.xlu0 %v1732, 64
        %v1747 = vpop.permute.xlu0 %1746
        %1748 = vrot.lane.b32.xlu0 %v1733, 64
        %v1749 = vpop.permute.xlu0 %1748
        %vm1758 = vcmask 1048064
        %1759 = vst.msk [vmem:[#allocation2 + $0x20] sm:$0xff] %vm1758, %v1735
        %vm1760 = vcmask 64512
        %1761 = vst.msk [vmem:[#allocation2 + $0x28] sm:$0xff] %vm1760, %v1735
        %1762 = vst.msk [vmem:[#allocation2 + $0x50] sm:$0xff] %vm1758, %v1737
        %1763 = vst.msk [vmem:[#allocation2 + $0x58] sm:$0xff] %vm1760, %v1737
        %1764 = vst.msk [vmem:[#allocation2 + $0x80] sm:$0xff] %vm1758, %v1739
        %1765 = vst.msk [vmem:[#allocation2 + $0x88] sm:$0xff] %vm1760, %v1739
        %1766 = vst.msk [vmem:[#allocation2 + $0xb0] sm:$0xff] %vm1758, %v1741
        %1767 = vst.msk [vmem:[#allocation2 + $0xb8] sm:$0xff] %vm1760, %v1741
        %1768 = vst.msk [vmem:[#allocation2 + $0xe0] sm:$0xff] %vm1758, %v1743
        %1769 = vst.msk [vmem:[#allocation2 + $0xe8] sm:$0xff] %vm1760, %v1743
        %1770 = vst.msk [vmem:[#allocation2 + $0x110] sm:$0xff] %vm1758, %v1745
        %1771 = vst.msk [vmem:[#allocation2 + $0x118] sm:$0xff] %vm1760, %v1745
        %1772 = vst.msk [vmem:[#allocation2 + $0x140] sm:$0xff] %vm1758, %v1747
        %1773 = vst.msk [vmem:[#allocation2 + $0x148] sm:$0xff] %vm1760, %v1747
        %1774 = vst.msk [vmem:[#allocation2 + $0x170] sm:$0xff] %vm1758, %v1749
        %1775 = vst.msk [vmem:[#allocation2 + $0x178] sm:$0xff] %vm1760, %v1749
        %v1776 = vld [vmem:[#allocation2] sm:$0xff]
        %v1777 = vld [vmem:[#allocation2 + $0x8] sm:$0xff]
        %v1778 = vld [vmem:[#allocation2 + $0x10] sm:$0xff]
        %v1779 = vld [vmem:[#allocation2 + $0x18] sm:$0xff]
        %v1780 = vld [vmem:[#allocation2 + $0x20] sm:$0xff]
        %v1781 = vld [vmem:[#allocation2 + $0x28] sm:$0xff]
        %v1782 = vld [vmem:[#allocation2 + $0x30] sm:$0xff]
        %v1783 = vld [vmem:[#allocation2 + $0x38] sm:$0xff]
        %v1784 = vld [vmem:[#allocation2 + $0x40] sm:$0xff]
        %v1785 = vld [vmem:[#allocation2 + $0x48] sm:$0xff]
        %v1786 = vld [vmem:[#allocation2 + $0x50] sm:$0xff]
        %v1787 = vld [vmem:[#allocation2 + $0x58] sm:$0xff]
        %v1788 = vld [vmem:[#allocation2 + $0x60] sm:$0xff]
        %v1789 = vld [vmem:[#allocation2 + $0x68] sm:$0xff]
        %v1790 = vld [vmem:[#allocation2 + $0x70] sm:$0xff]
        %v1791 = vld [vmem:[#allocation2 + $0x78] sm:$0xff]
        %v1792 = vld [vmem:[#allocation2 + $0x80] sm:$0xff]
        %v1793 = vld [vmem:[#allocation2 + $0x88] sm:$0xff]
        %v1794 = vld [vmem:[#allocation2 + $0x90] sm:$0xff]
        %v1795 = vld [vmem:[#allocation2 + $0x98] sm:$0xff]
        %v1796 = vld [vmem:[#allocation2 + $0xa0] sm:$0xff]
        %v1797 = vld [vmem:[#allocation2 + $0xa8] sm:$0xff]
        %v1798 = vld [vmem:[#allocation2 + $0xb0] sm:$0xff]
        %v1799 = vld [vmem:[#allocation2 + $0xb8] sm:$0xff]
        %v1800 = vld [vmem:[#allocation2 + $0xc0] sm:$0xff]
        %v1801 = vld [vmem:[#allocation2 + $0xc8] sm:$0xff]
        %v1802 = vld [vmem:[#allocation2 + $0xd0] sm:$0xff]
        %v1803 = vld [vmem:[#allocation2 + $0xd8] sm:$0xff]
        %v1804 = vld [vmem:[#allocation2 + $0xe0] sm:$0xff]
        %v1805 = vld [vmem:[#allocation2 + $0xe8] sm:$0xff]
        %v1806 = vld [vmem:[#allocation2 + $0xf0] sm:$0xff]
        %v1807 = vld [vmem:[#allocation2 + $0xf8] sm:$0xff]
        %v1808 = vld [vmem:[#allocation2 + $0x100] sm:$0xff]
        %v1809 = vld [vmem:[#allocation2 + $0x108] sm:$0xff]
        %v1810 = vld [vmem:[#allocation2 + $0x110] sm:$0xff]
        %v1811 = vld [vmem:[#allocation2 + $0x118] sm:$0xff]
        %v1812 = vld [vmem:[#allocation2 + $0x120] sm:$0xff]
        %v1813 = vld [vmem:[#allocation2 + $0x128] sm:$0xff]
        %v1814 = vld [vmem:[#allocation2 + $0x130] sm:$0xff]
        %v1815 = vld [vmem:[#allocation2 + $0x138] sm:$0xff]
        %v1816 = vld [vmem:[#allocation2 + $0x140] sm:$0xff]
        %v1817 = vld [vmem:[#allocation2 + $0x148] sm:$0xff]
        %v1818 = vld [vmem:[#allocation2 + $0x150] sm:$0xff]
        %v1819 = vld [vmem:[#allocation2 + $0x158] sm:$0xff]
        %v1820 = vld [vmem:[#allocation2 + $0x160] sm:$0xff]
        %v1821 = vld [vmem:[#allocation2 + $0x168] sm:$0xff]
        %v1822 = vld [vmem:[#allocation2 + $0x170] sm:$0xff]
        %v1823 = vld [vmem:[#allocation2 + $0x178] sm:$0xff]
        %v1824 = vld [vmem:[%s1] sm:$0xf]
        %v1825 = vld [vmem:[%s1 + $0x4] sm:$0xf]
        %v1826 = vld [vmem:[%s1 + $0x8] sm:$0xf]
        %v1827 = vld [vmem:[%s1 + $0xc] sm:$0xf]
        %v1828 = vld [vmem:[%s1 + $0x10] sm:$0xf]
        %v1829 = vld [vmem:[%s1 + $0x14] sm:$0xf]
        %v1830 = vld [vmem:[%s1 + $0x18] sm:$0xf]
        %v1831 = vld [vmem:[%s1 + $0x1c] sm:$0xf]
        %v1832 = vld [vmem:[%s1 + $0x20] sm:$0xf]
        %v1833 = vld [vmem:[%s1 + $0x24] sm:$0xf]
        %v1834 = vld [vmem:[%s1 + $0x28] sm:$0xf]
        %v1835 = vld [vmem:[%s1 + $0x2c] sm:$0xf]
        %v1836 = vld [vmem:[%s1 + $0x30] sm:$0xf]
        %v1837 = vld [vmem:[%s1 + $0x34] sm:$0xf]
        %v1838 = vld [vmem:[%s1 + $0x38] sm:$0xf]
        %v1839 = vld [vmem:[%s1 + $0x3c] sm:$0xf]
        %v1840 = vld [vmem:[%s1 + $0x40] sm:$0xf]
        %v1841 = vld [vmem:[%s1 + $0x44] sm:$0xf]
        %v1842 = vld [vmem:[%s1 + $0x48] sm:$0xf]
        %v1843 = vld [vmem:[%s1 + $0x4c] sm:$0xf]
        %v1844 = vld [vmem:[%s1 + $0x50] sm:$0xf]
        %v1845 = vld [vmem:[%s1 + $0x54] sm:$0xf]
        %v1846 = vld [vmem:[%s1 + $0x58] sm:$0xf]
        %v1847 = vld [vmem:[%s1 + $0x5c] sm:$0xf]
        %v1848 = vld [vmem:[%s1 + $0x60] sm:$0xf]
        %v1849 = vld [vmem:[%s1 + $0x64] sm:$0xf]
        %v1850 = vld [vmem:[%s1 + $0x68] sm:$0xf]
        %v1851 = vld [vmem:[%s1 + $0x6c] sm:$0xf]
        %v1852 = vld [vmem:[%s1 + $0x70] sm:$0xf]
        %v1853 = vld [vmem:[%s1 + $0x74] sm:$0xf]
        %v1854 = vld [vmem:[%s1 + $0x78] sm:$0xf]
        %v1855 = vld [vmem:[%s1 + $0x7c] sm:$0xf]
        %v1856 = vld [vmem:[%s1 + $0x80] sm:$0xf]
        %v1857 = vld [vmem:[%s1 + $0x84] sm:$0xf]
        %v1858 = vld [vmem:[%s1 + $0x88] sm:$0xf]
        %v1859 = vld [vmem:[%s1 + $0x8c] sm:$0xf]
        %v1860 = vld [vmem:[%s1 + $0x90] sm:$0xf]
        %v1861 = vld [vmem:[%s1 + $0x94] sm:$0xf]
        %v1862 = vld [vmem:[%s1 + $0x98] sm:$0xf]
        %v1863 = vld [vmem:[%s1 + $0x9c] sm:$0xf]
        %v1864 = vld [vmem:[%s1 + $0xa0] sm:$0xf]
        %v1865 = vld [vmem:[%s1 + $0xa4] sm:$0xf]
        %v1866 = vld [vmem:[%s1 + $0xa8] sm:$0xf]
        %v1867 = vld [vmem:[%s1 + $0xac] sm:$0xf]
        %v1868 = vld [vmem:[%s1 + $0xb0] sm:$0xf]
        %v1869 = vld [vmem:[%s1 + $0xb4] sm:$0xf]
        %v1870 = vld [vmem:[%s1 + $0xb8] sm:$0xf]
        %v1871 = vld [vmem:[%s1 + $0xbc] sm:$0xf]
        %v1872 = vld [vmem:[%s1 + $0xc0] sm:$0xf]
        %v1873 = vld [vmem:[%s1 + $0xc4] sm:$0xf]
        %v1874 = vld [vmem:[%s1 + $0xc8] sm:$0xf]
        %v1875 = vld [vmem:[%s1 + $0xcc] sm:$0xf]
        %v1876 = vld [vmem:[%s1 + $0xd0] sm:$0xf]
        %v1877 = vld [vmem:[%s1 + $0xd4] sm:$0xf]
        %v1878 = vld [vmem:[%s1 + $0xd8] sm:$0xf]
        %v1879 = vld [vmem:[%s1 + $0xdc] sm:$0xf]
        %v1880 = vld [vmem:[%s1 + $0xe0] sm:$0xf]
        %v1881 = vld [vmem:[%s1 + $0xe4] sm:$0xf]
        %v1882 = vld [vmem:[%s1 + $0xe8] sm:$0xf]
        %v1883 = vld [vmem:[%s1 + $0xec] sm:$0xf]
        %v1884 = vld [vmem:[%s1 + $0xf0] sm:$0xf]
        %v1885 = vld [vmem:[%s1 + $0xf4] sm:$0xf]
        %v1886 = vld [vmem:[%s1 + $0xf8] sm:$0xf]
        %v1887 = vld [vmem:[%s1 + $0xfc] sm:$0xf]
        %v1888 = vld [vmem:[%s1 + $0x100] sm:$0xf]
        %v1889 = vld [vmem:[%s1 + $0x104] sm:$0xf]
        %v1890 = vld [vmem:[%s1 + $0x108] sm:$0xf]
        %v1891 = vld [vmem:[%s1 + $0x10c] sm:$0xf]
        %v1892 = vld [vmem:[%s1 + $0x110] sm:$0xf]
        %v1893 = vld [vmem:[%s1 + $0x114] sm:$0xf]
        %v1894 = vld [vmem:[%s1 + $0x118] sm:$0xf]
        %v1895 = vld [vmem:[%s1 + $0x11c] sm:$0xf]
        %v1896 = vld [vmem:[%s1 + $0x120] sm:$0xf]
        %v1897 = vld [vmem:[%s1 + $0x124] sm:$0xf]
        %v1898 = vld [vmem:[%s1 + $0x128] sm:$0xf]
        %v1899 = vld [vmem:[%s1 + $0x12c] sm:$0xf]
        %v1900 = vld [vmem:[%s1 + $0x130] sm:$0xf]
        %v1901 = vld [vmem:[%s1 + $0x134] sm:$0xf]
        %v1902 = vld [vmem:[%s1 + $0x138] sm:$0xf]
        %v1903 = vld [vmem:[%s1 + $0x13c] sm:$0xf]
        %v1904 = vld [vmem:[%s1 + $0x140] sm:$0xf]
        %v1905 = vld [vmem:[%s2] sm:$0x1]
        %v1907 = vlaneseq
        %v1908 = vshrl.u32 %v1907, 7
        %v1909 = vsub.s32 0, %v1908
        %v1910 = vrot.slane %v1905, %v1909
        %v1993 = vunpack.c.l.b16 %v1824
        %v1994 = vunpack.c.l.b16 %v1825
        %v1995 = vunpack.c.l.b16 %v1826
        %v1996 = vunpack.c.l.b16 %v1827
        %v1997 = vunpack.c.l.b16 %v1828
        %v1998 = vunpack.c.l.b16 %v1829
        %v1999 = vunpack.c.l.b16 %v1830
        %v2000 = vunpack.c.l.b16 %v1831
        %v2001 = vunpack.c.l.b16 %v1832
        %v2002 = vunpack.c.l.b16 %v1833
        %v2003 = vunpack.c.l.b16 %v1834
        %v2004 = vunpack.c.l.b16 %v1835
        %v2005 = vunpack.c.l.b16 %v1836
        %v2006 = vunpack.c.l.b16 %v1837
        %v2007 = vunpack.c.l.b16 %v1838
        %v2008 = vunpack.c.l.b16 %v1839
        %v2009 = vunpack.c.l.b16 %v1840
        %v2010 = vunpack.c.l.b16 %v1841
        %v2011 = vunpack.c.l.b16 %v1842
        %v2012 = vunpack.c.l.b16 %v1843
        %v2013 = vunpack.c.l.b16 %v1844
        %v2014 = vunpack.c.l.b16 %v1845
        %v2015 = vunpack.c.l.b16 %v1846
        %v2016 = vunpack.c.l.b16 %v1847
        %v2017 = vunpack.c.l.b16 %v1848
        %v2018 = vunpack.c.l.b16 %v1849
        %v2019 = vunpack.c.l.b16 %v1850
        %v2020 = vunpack.c.l.b16 %v1851
        %v2021 = vunpack.c.l.b16 %v1852
        %v2022 = vunpack.c.l.b16 %v1853
        %v2023 = vunpack.c.l.b16 %v1854
        %v2024 = vunpack.c.l.b16 %v1855
        %v2025 = vunpack.c.l.b16 %v1856
        %v2026 = vunpack.c.l.b16 %v1857
        %v2027 = vunpack.c.l.b16 %v1858
        %v2028 = vunpack.c.l.b16 %v1859
        %v2029 = vunpack.c.l.b16 %v1860
        %v2030 = vunpack.c.l.b16 %v1861
        %v2031 = vunpack.c.l.b16 %v1862
        %v2032 = vunpack.c.l.b16 %v1863
        %v2033 = vunpack.c.l.b16 %v1864
        %v2034 = vunpack.c.l.b16 %v1865
        %v2035 = vunpack.c.l.b16 %v1866
        %v2036 = vunpack.c.l.b16 %v1867
        %v2037 = vunpack.c.l.b16 %v1868
        %v2038 = vunpack.c.l.b16 %v1869
        %v2039 = vunpack.c.l.b16 %v1870
        %v2040 = vunpack.c.l.b16 %v1871
        %v2041 = vunpack.c.l.b16 %v1872
        %v2042 = vunpack.c.l.b16 %v1873
        %v2043 = vunpack.c.l.b16 %v1874
        %v2044 = vunpack.c.l.b16 %v1875
        %v2045 = vunpack.c.l.b16 %v1876
        %v2046 = vunpack.c.l.b16 %v1877
        %v2047 = vunpack.c.l.b16 %v1878
        %v2048 = vunpack.c.l.b16 %v1879
        %v2049 = vunpack.c.l.b16 %v1880
        %v2050 = vunpack.c.l.b16 %v1881
        %v2051 = vunpack.c.l.b16 %v1882
        %v2052 = vunpack.c.l.b16 %v1883
        %v2053 = vunpack.c.l.b16 %v1884
        %v2054 = vunpack.c.l.b16 %v1885
        %v2055 = vunpack.c.l.b16 %v1886
        %v2056 = vunpack.c.l.b16 %v1887
        %v2057 = vunpack.c.l.b16 %v1888
        %v2058 = vunpack.c.l.b16 %v1889
        %v2059 = vunpack.c.l.b16 %v1890
        %v2060 = vunpack.c.l.b16 %v1891
        %v2061 = vunpack.c.l.b16 %v1892
        %v2062 = vunpack.c.l.b16 %v1893
        %v2063 = vunpack.c.l.b16 %v1894
        %v2064 = vunpack.c.l.b16 %v1895
        %v2065 = vunpack.c.l.b16 %v1896
        %v2066 = vunpack.c.l.b16 %v1897
        %v2067 = vunpack.c.l.b16 %v1898
        %v2068 = vunpack.c.l.b16 %v1899
        %v2069 = vunpack.c.l.b16 %v1900
        %v2070 = vunpack.c.l.b16 %v1901
        %v2071 = vunpack.c.l.b16 %v1902
        %v2072 = vunpack.c.l.b16 %v1903
        %v2073 = vunpack.c.l.b16 %v1904
        %v2074 = vpack.c.b16 %v1994, %v1993
        %v2075 = vpack.c.b16 %v1996, %v1995
        %v2076 = vpack.c.b16 %v1998, %v1997
        %v2077 = vpack.c.b16 %v2000, %v1999
        %v2078 = vpack.c.b16 %v2002, %v2001
        %v2079 = vpack.c.b16 %v2004, %v2003
        %v2080 = vpack.c.b16 %v2006, %v2005
        %v2081 = vpack.c.b16 %v2008, %v2007
        %v2082 = vpack.c.b16 %v2010, %v2009
        %v2083 = vpack.c.b16 %v2012, %v2011
        %v2084 = vpack.c.b16 %v2014, %v2013
        %v2085 = vpack.c.b16 %v2016, %v2015
        %v2086 = vpack.c.b16 %v2018, %v2017
        %v2087 = vpack.c.b16 %v2020, %v2019
        %v2088 = vpack.c.b16 %v2022, %v2021
        %v2089 = vpack.c.b16 %v2024, %v2023
        %v2090 = vpack.c.b16 %v2026, %v2025
        %v2091 = vpack.c.b16 %v2028, %v2027
        %v2092 = vpack.c.b16 %v2030, %v2029
        %v2093 = vpack.c.b16 %v2032, %v2031
        %v2094 = vpack.c.b16 %v2034, %v2033
        %v2095 = vpack.c.b16 %v2036, %v2035
        %v2096 = vpack.c.b16 %v2038, %v2037
        %v2097 = vpack.c.b16 %v2040, %v2039
        %v2098 = vpack.c.b16 %v2042, %v2041
        %v2099 = vpack.c.b16 %v2044, %v2043
        %v2100 = vpack.c.b16 %v2046, %v2045
        %v2101 = vpack.c.b16 %v2048, %v2047
        %v2102 = vpack.c.b16 %v2050, %v2049
        %v2103 = vpack.c.b16 %v2052, %v2051
        %v2104 = vpack.c.b16 %v2054, %v2053
        %v2105 = vpack.c.b16 %v2056, %v2055
        %v2106 = vpack.c.b16 %v2058, %v2057
        %v2107 = vpack.c.b16 %v2060, %v2059
        %v2108 = vpack.c.b16 %v2062, %v2061
        %v2109 = vpack.c.b16 %v2064, %v2063
        %v2110 = vpack.c.b16 %v2066, %v2065
        %v2111 = vpack.c.b16 %v2068, %v2067
        %v2112 = vpack.c.b16 %v2070, %v2069
        %v2113 = vpack.c.b16 %v2072, %v2071
        %v2114 = vpack.c.b16 %v2073, %v2073
        %v2156 = vsel %vm1760, %v1781, 0
        %v2159 = vsel %vm1760, %v1787, 0
        %v2162 = vsel %vm1760, %v1793, 0
        %v2165 = vsel %vm1760, %v1799, 0
        %v2168 = vsel %vm1760, %v1805, 0
        %v2171 = vsel %vm1760, %v1811, 0
        %v2174 = vsel %vm1760, %v1817, 0
        %v2177 = vsel %vm1760, %v1823, 0
        %vm2179 = vcmask 1043456
        %v2181 = vsel %vm2179, %v2114, 0
        %2183 = vmatprep.subr.bf16.mxu0 0
        %2184 = vmatpush1.bf16.msra.mxu0 %v2074
        %2185 = vmatprep.subr.bf16.mxu0 0
        %2186 = vmatpush1.bf16.msra.mxu0 %v2075
        %2187 = vmatprep.subr.bf16.mxu0 0
        %2188 = vmatpush1.bf16.msra.mxu0 %v2076
        %2189 = vmatprep.subr.bf16.mxu0 0
        %2190 = vmatpush1.bf16.msra.mxu0 %v2077
        %2191 = vmatprep.subr.bf16.mxu0 0
        %2192 = vmatpush1.bf16.msra.mxu0 %v2078
        %2193 = vmatprep.subr.bf16.mxu0 0
        %2194 = vmatpush1.bf16.msra.mxu0 %v2079
        %2195 = vmatprep.subr.bf16.mxu0 0
        %2196 = vmatpush1.bf16.msra.mxu0 %v2080
        %2197 = vmatprep.subr.bf16.mxu0 0
        %2198 = vmatpush1.bf16.msra.mxu0 %v2081
        %2199 = vmatprep.subr.bf16.mxu0 0
        %2200 = vmatpush1.bf16.msra.mxu0 %v2082
        %2201 = vmatprep.subr.bf16.mxu0 0
        %2202 = vmatpush1.bf16.msra.mxu0 %v2083
        %2203 = vmatprep.subr.bf16.mxu0 0
        %2204 = vmatpush1.bf16.msra.mxu0 %v2084
        %2205 = vmatprep.subr.bf16.mxu0 0
        %2206 = vmatpush1.bf16.msra.mxu0 %v2085
        %2207 = vmatprep.subr.bf16.mxu0 0
        %2208 = vmatpush1.bf16.msra.mxu0 %v2086
        %2209 = vmatprep.subr.bf16.mxu0 0
        %2210 = vmatpush1.bf16.msra.mxu0 %v2087
        %2211 = vmatprep.subr.bf16.mxu0 0
        %2212 = vmatpush1.bf16.msra.mxu0 %v2088
        %2213 = vmatprep.subr.bf16.mxu0 0
        %2214 = vmatpush1.bf16.msra.mxu0 %v2089
        %2215 = vmatprep.mubr.bf16.mxu0 %v1777
        %2216 = vmatmul.mubr.bf16.gmra.mrb[0].mxu0 %v1776
        %v2217 = vpop.f32.mrb[0].mxu0
        %v2218 = vadd.f32 %v1910, %v2217
        %v2219 = vpop.f32.mrb[0].mxu0
        %v2220 = vpop.f32.mrb[0].mxu0
        %v2221 = vadd.f32 %v1910, %v2220
        %v2222 = vpop.f32.mrb[0].mxu0
        %2223 = vmatprep.mubr.bf16.mxu0 %v1783
        %2224 = vmatmul.mubr.bf16.gmra.mrb[0].mxu0 %v1782
        %v2225 = vpop.f32.mrb[0].mxu0
        %v2226 = vadd.f32 %v1910, %v2225
        %v2227 = vpop.f32.mrb[0].mxu0
        %v2228 = vpop.f32.mrb[0].mxu0
        %v2229 = vadd.f32 %v1910, %v2228
        %v2230 = vpop.f32.mrb[0].mxu0
        %2231 = vmatprep.mubr.bf16.mxu0 %v1789
        %2232 = vmatmul.mubr.bf16.gmra.mrb[0].mxu0 %v1788
        %v2233 = vpop.f32.mrb[0].mxu0
        %v2234 = vadd.f32 %v1910, %v2233
        %v2235 = vpop.f32.mrb[0].mxu0
        %v2236 = vpop.f32.mrb[0].mxu0
        %v2237 = vadd.f32 %v1910, %v2236
        %v2238 = vpop.f32.mrb[0].mxu0
        %2239 = vmatprep.mubr.bf16.mxu0 %v1795
        %2240 = vmatmul.mubr.bf16.gmra.mrb[0].mxu0 %v1794
        %v2241 = vpop.f32.mrb[0].mxu0
        %v2242 = vadd.f32 %v1910, %v2241
        %v2243 = vpop.f32.mrb[0].mxu0
        %v2244 = vpop.f32.mrb[0].mxu0
        %v2245 = vadd.f32 %v1910, %v2244
        %v2246 = vpop.f32.mrb[0].mxu0
        %2247 = vmatprep.mubr.bf16.mxu0 %v1801
        %2248 = vmatmul.mubr.bf16.gmra.mrb[0].mxu0 %v1800
        %v2249 = vpop.f32.mrb[0].mxu0
        %v2250 = vadd.f32 %v1910, %v2249
        %v2251 = vpop.f32.mrb[0].mxu0
        %v2252 = vpop.f32.mrb[0].mxu0
        %v2253 = vadd.f32 %v1910, %v2252
        %v2254 = vpop.f32.mrb[0].mxu0
        %2255 = vmatprep.mubr.bf16.mxu0 %v1807
        %2256 = vmatmul.mubr.bf16.gmra.mrb[0].mxu0 %v1806
        %v2257 = vpop.f32.mrb[0].mxu0
        %v2258 = vadd.f32 %v1910, %v2257
        %v2259 = vpop.f32.mrb[0].mxu0
        %v2260 = vpop.f32.mrb[0].mxu0
        %v2261 = vadd.f32 %v1910, %v2260
        %v2262 = vpop.f32.mrb[0].mxu0
        %2263 = vmatprep.mubr.bf16.mxu0 %v1813
        %2264 = vmatmul.mubr.bf16.gmra.mrb[0].mxu0 %v1812
        %v2265 = vpop.f32.mrb[0].mxu0
        %v2266 = vadd.f32 %v1910, %v2265
        %v2267 = vpop.f32.mrb[0].mxu0
        %v2268 = vpop.f32.mrb[0].mxu0
        %v2269 = vadd.f32 %v1910, %v2268
        %v2270 = vpop.f32.mrb[0].mxu0
        %2271 = vmatprep.mubr.bf16.mxu0 %v1819
        %2272 = vmatmul.mubr.bf16.gmra.mrb[0].mxu0 %v1818
        %v2273 = vpop.f32.mrb[0].mxu0
        %v2274 = vadd.f32 %v1910, %v2273
        %v2275 = vpop.f32.mrb[0].mxu0
        %v2276 = vpop.f32.mrb[0].mxu0
        %v2277 = vadd.f32 %v1910, %v2276
        %v2278 = vpop.f32.mrb[0].mxu0
        %2279 = vdwg.mxu0
        %2280 = vmatprep.subr.bf16.mxu0 0
        %2281 = vmatpush1.bf16.msra.mxu0 %v2090
        %2282 = vmatprep.subr.bf16.mxu0 0
        %2283 = vmatpush1.bf16.msra.mxu0 %v2091
        %2284 = vmatprep.subr.bf16.mxu0 0
        %2285 = vmatpush1.bf16.msra.mxu0 %v2092
        %2286 = vmatprep.subr.bf16.mxu0 0
        %2287 = vmatpush1.bf16.msra.mxu0 %v2093
        %2288 = vmatprep.subr.bf16.mxu0 0
        %2289 = vmatpush1.bf16.msra.mxu0 %v2094
        %2290 = vmatprep.subr.bf16.mxu0 0
        %2291 = vmatpush1.bf16.msra.mxu0 %v2095
        %2292 = vmatprep.subr.bf16.mxu0 0
        %2293 = vmatpush1.bf16.msra.mxu0 %v2096
        %2294 = vmatprep.subr.bf16.mxu0 0
        %2295 = vmatpush1.bf16.msra.mxu0 %v2097
        %2296 = vmatprep.subr.bf16.mxu0 0
        %2297 = vmatpush1.bf16.msra.mxu0 %v2098
        %2298 = vmatprep.subr.bf16.mxu0 0
        %2299 = vmatpush1.bf16.msra.mxu0 %v2099
        %2300 = vmatprep.subr.bf16.mxu0 0
        %2301 = vmatpush1.bf16.msra.mxu0 %v2100
        %2302 = vmatprep.subr.bf16.mxu0 0
        %2303 = vmatpush1.bf16.msra.mxu0 %v2101
        %2304 = vmatprep.subr.bf16.mxu0 0
        %2305 = vmatpush1.bf16.msra.mxu0 %v2102
        %2306 = vmatprep.subr.bf16.mxu0 0
        %2307 = vmatpush1.bf16.msra.mxu0 %v2103
        %2308 = vmatprep.subr.bf16.mxu0 0
        %2309 = vmatpush1.bf16.msra.mxu0 %v2104
        %2310 = vmatprep.subr.bf16.mxu0 0
        %2311 = vmatpush1.bf16.msra.mxu0 %v2105
        %2312 = vmatprep.mubr.bf16.mxu0 %v1779
        %2313 = vmatmul.mubr.bf16.gmra.mrb[0].mxu0 %v1778
        %v2314 = vpop.f32.mrb[0].mxu0
        %v2315 = vadd.f32 %v2218, %v2314
        %v2316 = vpop.f32.mrb[0].mxu0
        %v2317 = vpop.f32.mrb[0].mxu0
        %v2318 = vadd.f32 %v2221, %v2317
        %v2319 = vpop.f32.mrb[0].mxu0
        %2320 = vmatprep.mubr.bf16.mxu0 %v1785
        %2321 = vmatmul.mubr.bf16.gmra.mrb[0].mxu0 %v1784
        %v2322 = vpop.f32.mrb[0].mxu0
        %v2323 = vadd.f32 %v2226, %v2322
        %v2324 = vpop.f32.mrb[0].mxu0
        %v2325 = vpop.f32.mrb[0].mxu0
        %v2326 = vadd.f32 %v2229, %v2325
        %v2327 = vpop.f32.mrb[0].mxu0
        %2328 = vmatprep.mubr.bf16.mxu0 %v1791
        %2329 = vmatmul.mubr.bf16.gmra.mrb[0].mxu0 %v1790
        %v2330 = vpop.f32.mrb[0].mxu0
        %v2331 = vadd.f32 %v2234, %v2330
        %v2332 = vpop.f32.mrb[0].mxu0
        %v2333 = vpop.f32.mrb[0].mxu0
        %v2334 = vadd.f32 %v2237, %v2333
        %v2335 = vpop.f32.mrb[0].mxu0
        %2336 = vmatprep.mubr.bf16.mxu0 %v1797
        %2337 = vmatmul.mubr.bf16.gmra.mrb[0].mxu0 %v1796
        %v2338 = vpop.f32.mrb[0].mxu0
        %v2339 = vadd.f32 %v2242, %v2338
        %v2340 = vpop.f32.mrb[0].mxu0
        %v2341 = vpop.f32.mrb[0].mxu0
        %v2342 = vadd.f32 %v2245, %v2341
        %v2343 = vpop.f32.mrb[0].mxu0
        %2344 = vmatprep.mubr.bf16.mxu0 %v1803
        %2345 = vmatmul.mubr.bf16.gmra.mrb[0].mxu0 %v1802
        %v2346 = vpop.f32.mrb[0].mxu0
        %v2347 = vadd.f32 %v2250, %v2346
        %v2348 = vpop.f32.mrb[0].mxu0
        %v2349 = vpop.f32.mrb[0].mxu0
        %v2350 = vadd.f32 %v2253, %v2349
        %v2351 = vpop.f32.mrb[0].mxu0
        %2352 = vmatprep.mubr.bf16.mxu0 %v1809
        %2353 = vmatmul.mubr.bf16.gmra.mrb[0].mxu0 %v1808
        %v2354 = vpop.f32.mrb[0].mxu0
        %v2355 = vadd.f32 %v2258, %v2354
        %v2356 = vpop.f32.mrb[0].mxu0
        %v2357 = vpop.f32.mrb[0].mxu0
        %v2358 = vadd.f32 %v2261, %v2357
        %v2359 = vpop.f32.mrb[0].mxu0
        %2360 = vmatprep.mubr.bf16.mxu0 %v1815
        %2361 = vmatmul.mubr.bf16.gmra.mrb[0].mxu0 %v1814
        %v2362 = vpop.f32.mrb[0].mxu0
        %v2363 = vadd.f32 %v2266, %v2362
        %v2364 = vpop.f32.mrb[0].mxu0
        %v2365 = vpop.f32.mrb[0].mxu0
        %v2366 = vadd.f32 %v2269, %v2365
        %v2367 = vpop.f32.mrb[0].mxu0
        %2368 = vmatprep.mubr.bf16.mxu0 %v1821
        %2369 = vmatmul.mubr.bf16.gmra.mrb[0].mxu0 %v1820
        %v2370 = vpop.f32.mrb[0].mxu0
        %v2371 = vadd.f32 %v2274, %v2370
        %v2372 = vpop.f32.mrb[0].mxu0
        %v2373 = vpop.f32.mrb[0].mxu0
        %v2374 = vadd.f32 %v2277, %v2373
        %v2375 = vpop.f32.mrb[0].mxu0
        %2376 = vdwg.mxu0
        %2377 = vmatprep.subr.bf16.mxu0 0
        %2378 = vmatpush1.bf16.msra.mxu0 %v2106
        %2379 = vmatprep.subr.bf16.mxu0 0
        %2380 = vmatpush1.bf16.msra.mxu0 %v2107
        %2381 = vmatprep.subr.bf16.mxu0 0
        %2382 = vmatpush1.bf16.msra.mxu0 %v2108
        %2383 = vmatprep.subr.bf16.mxu0 0
        %2384 = vmatpush1.bf16.msra.mxu0 %v2109
        %2385 = vmatprep.subr.bf16.mxu0 0
        %2386 = vmatpush1.bf16.msra.mxu0 %v2110
        %2387 = vmatprep.subr.bf16.mxu0 0
        %2388 = vmatpush1.bf16.msra.mxu0 %v2111
        %2389 = vmatprep.subr.bf16.mxu0 0
        %2390 = vmatpush1.bf16.msra.mxu0 %v2112
        %2391 = vmatprep.subr.bf16.mxu0 0
        %2392 = vmatpush1.bf16.msra.mxu0 %v2113
        %2393 = vmatprep.subr.bf16.mxu0 0
        %2394 = vmatpush1.bf16.msra.mxu0 %v2181
        %2395 = vmatprep.subr.bf16.mxu0 0
        %2396 = vmatpush1.bf16.msra.mxu0 0
        %2397 = vmatprep.subr.bf16.mxu0 0
        %2398 = vmatpush1.bf16.msra.mxu0 0
        %2399 = vmatprep.subr.bf16.mxu0 0
        %2400 = vmatpush1.bf16.msra.mxu0 0
        %2401 = vmatprep.subr.bf16.mxu0 0
        %2402 = vmatpush1.bf16.msra.mxu0 0
        %2403 = vmatprep.subr.bf16.mxu0 0
        %2404 = vmatpush1.bf16.msra.mxu0 0
        %2405 = vmatprep.subr.bf16.mxu0 0
        %2406 = vmatpush1.bf16.msra.mxu0 0
        %2407 = vmatprep.subr.bf16.mxu0 0
        %2408 = vmatpush1.bf16.msra.mxu0 0
        %2409 = vmatprep.mubr.bf16.mxu0 %v2156
        %2410 = vmatmul.mubr.bf16.gmra.mrb[0].mxu0 %v1780
        %v2411 = vpop.f32.mrb[0].mxu0
        %v2412 = vadd.f32 %v2315, %v2411
        %v2413 = vpop.f32.mrb[0].mxu0
        %v2414 = vpop.f32.mrb[0].mxu0
        %v2415 = vadd.f32 %v2318, %v2414
        %v2416 = vpop.f32.mrb[0].mxu0
        %2417 = vmatprep.mubr.bf16.mxu0 %v2159
        %2418 = vmatmul.mubr.bf16.gmra.mrb[0].mxu0 %v1786
        %v2419 = vpop.f32.mrb[0].mxu0
        %v2420 = vadd.f32 %v2323, %v2419
        %v2421 = vpop.f32.mrb[0].mxu0
        %v2422 = vpop.f32.mrb[0].mxu0
        %v2423 = vadd.f32 %v2326, %v2422
        %v2424 = vpop.f32.mrb[0].mxu0
        %2425 = vmatprep.mubr.bf16.mxu0 %v2162
        %2426 = vmatmul.mubr.bf16.gmra.mrb[0].mxu0 %v1792
        %v2427 = vpop.f32.mrb[0].mxu0
        %v2428 = vadd.f32 %v2331, %v2427
        %v2429 = vpop.f32.mrb[0].mxu0
        %v2430 = vpop.f32.mrb[0].mxu0
        %v2431 = vadd.f32 %v2334, %v2430
        %v2432 = vpop.f32.mrb[0].mxu0
        %2433 = vmatprep.mubr.bf16.mxu0 %v2165
        %2434 = vmatmul.mubr.bf16.gmra.mrb[0].mxu0 %v1798
        %v2435 = vpop.f32.mrb[0].mxu0
        %v2436 = vadd.f32 %v2339, %v2435
        %v2437 = vpop.f32.mrb[0].mxu0
        %v2438 = vpop.f32.mrb[0].mxu0
        %v2439 = vadd.f32 %v2342, %v2438
        %v2440 = vpop.f32.mrb[0].mxu0
        %2441 = vmatprep.mubr.bf16.mxu0 %v2168
        %2442 = vmatmul.mubr.bf16.gmra.mrb[0].mxu0 %v1804
        %v2443 = vpop.f32.mrb[0].mxu0
        %v2444 = vadd.f32 %v2347, %v2443
        %v2445 = vpop.f32.mrb[0].mxu0
        %v2446 = vpop.f32.mrb[0].mxu0
        %v2447 = vadd.f32 %v2350, %v2446
        %v2448 = vpop.f32.mrb[0].mxu0
        %2449 = vmatprep.mubr.bf16.mxu0 %v2171
        %2450 = vmatmul.mubr.bf16.gmra.mrb[0].mxu0 %v1810
        %v2451 = vpop.f32.mrb[0].mxu0
        %v2452 = vadd.f32 %v2355, %v2451
        %v2453 = vpop.f32.mrb[0].mxu0
        %v2454 = vpop.f32.mrb[0].mxu0
        %v2455 = vadd.f32 %v2358, %v2454
        %v2456 = vpop.f32.mrb[0].mxu0
        %2457 = vmatprep.mubr.bf16.mxu0 %v2174
        %2458 = vmatmul.mubr.bf16.gmra.mrb[0].mxu0 %v1816
        %v2459 = vpop.f32.mrb[0].mxu0
        %v2460 = vadd.f32 %v2363, %v2459
        %v2461 = vpop.f32.mrb[0].mxu0
        %v2462 = vpop.f32.mrb[0].mxu0
        %v2463 = vadd.f32 %v2366, %v2462
        %v2464 = vpop.f32.mrb[0].mxu0
        %2465 = vmatprep.mubr.bf16.mxu0 %v2177
        %2466 = vmatmul.mubr.bf16.gmra.mrb[0].mxu0 %v1822
        %v2467 = vpop.f32.mrb[0].mxu0
        %v2468 = vadd.f32 %v2371, %v2467
        %v2469 = vpop.f32.mrb[0].mxu0
        %v2470 = vpop.f32.mrb[0].mxu0
        %v2471 = vadd.f32 %v2374, %v2470
        %v2472 = vpop.f32.mrb[0].mxu0
        %2473 = vdwg.mxu0
        %v2474 = vmax.f32 %v2412, 0.0
        %v2475 = vmax.f32 %v2415, 0.0
        %v2476 = vmax.f32 %v2420, 0.0
        %v2477 = vmax.f32 %v2423, 0.0
        %v2478 = vmax.f32 %v2428, 0.0
        %v2479 = vmax.f32 %v2431, 0.0
        %v2480 = vmax.f32 %v2436, 0.0
        %v2481 = vmax.f32 %v2439, 0.0
        %v2482 = vmax.f32 %v2444, 0.0
        %v2483 = vmax.f32 %v2447, 0.0
        %v2484 = vmax.f32 %v2452, 0.0
        %v2485 = vmax.f32 %v2455, 0.0
        %v2486 = vmax.f32 %v2460, 0.0
        %v2487 = vmax.f32 %v2463, 0.0
        %v2488 = vmax.f32 %v2468, 0.0
        %v2489 = vmax.f32 %v2471, 0.0
        %2490 = vst [vmem:[%s163] sm:$0xff] %v2474
        %2491 = vst [vmem:[%s163 + $0x8] sm:$0xff] %v2475
        %2492 = vst [vmem:[%s163 + $0x10] sm:$0xff] %v2476
        %2493 = vst [vmem:[%s163 + $0x18] sm:$0xff] %v2477
        %2494 = vst [vmem:[%s163 + $0x20] sm:$0xff] %v2478
        %2495 = vst [vmem:[%s163 + $0x28] sm:$0xff] %v2479
        %2496 = vst [vmem:[%s163 + $0x30] sm:$0xff] %v2480
        %2497 = vst [vmem:[%s163 + $0x38] sm:$0xff] %v2481
        %2498 = vst [vmem:[%s163 + $0x40] sm:$0xff] %v2482
        %2499 = vst [vmem:[%s163 + $0x48] sm:$0xff] %v2483
        %2500 = vst [vmem:[%s163 + $0x50] sm:$0xff] %v2484
        %2501 = vst [vmem:[%s163 + $0x58] sm:$0xff] %v2485
        %2502 = vst [vmem:[%s163 + $0x60] sm:$0xff] %v2486
        %2503 = vst [vmem:[%s163 + $0x68] sm:$0xff] %v2487
        %2504 = vst [vmem:[%s163 + $0x70] sm:$0xff] %v2488
        %2505 = vst [vmem:[%s163 + $0x78] sm:$0xff] %v2489
        %s2506 = sand.u32 %s93, 1
        %s2507 = scalar_lea.sflag [#allocation4], %s2506
        %s2508 = sand.u32 %s93, 1
        %s2509 = smul.addr %s2508, 128
        %s2510 = scalar_lea.vmem [#allocation3], %s2509
        // Predicated region
        $region33: #{tpu_custom_call.1} parent=31 // pred_check
          %p2511 = pneg %p103
        $region34: #{tpu_custom_call.1} parent=31 // pred_check_branch
          %2513 = sbr.rel (%p2511) target = $region36
        $region35: #{tpu_custom_call.1} parent=31 // pred_region
          %s2515 = ssub.s32 2048, 2048
          %2516 = vsyncadd %s2507, %s2515
          %s2517 = smul.addr %s17, 16
          %s2518 = smul.addr %s2517, 128
          %s2519 = scalar_lea.hbm %s3, %s2518
          %s2520 = sshll.u32 %s2510, 4
          %s2521 = int_to_ptr.vmem [resolvable:$true] %s2520
          %2526 = dma.vmem_to_hbm [thread:$0]  %s2521, 2048, %s2519, %s2507, 128, 128, 8
        $region36: #{tpu_custom_call.1} parent=31 // pred_fallthru
          _
      $region32: #{tpu_custom_call.1} parent=5 // pred_fallthru
        _
      %p2527 = scmp.le.s32.totalorder 2, %s12
      // Predicated region
      $region37: #{tpu_custom_call.1} parent=5 // pred_check
        %p2528 = pneg %p2527
      $region38: #{tpu_custom_call.1} parent=5 // pred_check_branch
        %2530 = sbr.rel (%p2528) target = $region40
      $region39: #{tpu_custom_call.1} parent=5 // pred_region
        %s2531 = ssub.s32 %s12, 2
        // Predicated region
        $region41: #{tpu_custom_call.1} parent=39 // pred_check
          %p2532 = pneg %p109
        $region42: #{tpu_custom_call.1} parent=39 // pred_check_branch
          %2534 = sbr.rel (%p2532) target = $region44
        $region43: #{tpu_custom_call.1} parent=39 // pred_region
          %s2535 = sand.u32 %s94, 1
          %s2536 = scalar_lea.sflag [#allocation4], %s2535
          %s2537 = sand.u32 %s94, 1
          %s2538 = smul.addr %s2537, 128
          %s2539 = scalar_lea.vmem [#allocation3], %s2538
          %2540 = dma.done %s2536, 2048
        $region44: #{tpu_custom_call.1} parent=39 // pred_fallthru
          _
      $region40: #{tpu_custom_call.1} parent=5 // pred_fallthru
        _
    $region6: #{tpu_custom_call.1} parent=1 // loop_footer
      %s16 = sadd.s32 1, %s12
    $region7: #{tpu_custom_call.1} parent=1 // loop_footer_branch
      %11 = sbr.rel target = $region3
    $region8: #{tpu_custom_call.1} parent=1 // loop_exit
      _
    %2541 = vsyncpa [#allocation4], 1
    %s2542 = scalar_lea.sflag [#allocation4], 1
    %2543 = vsyncpa %s2542, 1

</llo_original>
